<compile_context>
chip_gen: v7x
topology: tpu7x:2x2x1
jax: 0.10.0
libtpu: 0.0.40
codegen_flags: <defaults>
</compile_context>

<pallas_src>
import functools

import jax
import jax.numpy as jnp
from jax import lax
from jax.experimental import pallas as pl
from jax.experimental.pallas import tpu as pltpu

LN_EPS = 1e-5
_LANES = 128
_TILE_BYTES = 2 * 1024 * 1024  # ~2 MiB per pipelined buffer (sweet spot per measured roofline)


def _round_up(x: int, m: int) -> int:
    return ((x + m - 1) // m) * m


def _make_interp_matrix(d_in: int, d_out: int) -> jnp.ndarray:
    """Matrix W (d_in, d_out) s.t. y = x @ W matches
    F.interpolate(mode='linear', align_corners=True) along the last axis."""
    if d_in == d_out:
        return jnp.eye(d_in, dtype=jnp.float32)
    j = jnp.arange(d_out, dtype=jnp.float32)
    scale = (d_in - 1) / (d_out - 1) if d_out > 1 else 0.0  # guard d_out == 1
    pos = j * scale
    i0 = jnp.floor(pos).astype(jnp.int32)
    i1 = jnp.clip(i0 + 1, 0, d_in - 1)
    frac = pos - i0.astype(jnp.float32)
    rows = jnp.arange(d_in, dtype=jnp.int32)[:, None]
    w = ((rows == i0[None, :]).astype(jnp.float32) * (1.0 - frac)[None, :]
         + (rows == i1[None, :]).astype(jnp.float32) * frac[None, :])
    return w.astype(jnp.float32)


def _make_kernel(with_matmul: bool, segmented: bool, inv_n: float):
    """Build a kernel.  Ref order: x, [w], params, [seg], out."""

    def kernel(*refs):
        o_ref = refs[-1]
        idx = 0
        x = refs[idx][...].astype(jnp.float32)
        idx += 1
        if with_matmul:
            # Gate is pre-folded into w; (TM, P_in) @ (P_in, P_out) on the MXU.
            w = refs[idx][...]
            idx += 1
            y = jnp.dot(x, w, precision=lax.Precision.HIGHEST,
                        preferred_element_type=jnp.float32)
            p = refs[idx][...]
            idx += 1
            g, b = p[0:1, :], p[1:2, :]
        else:
            # Identity resample fast path: just the gate scale.
            p = refs[idx][...]
            idx += 1
            y = x * p[0:1, :]
            g, b = p[1:2, :], p[2:3, :]

        if segmented:
            # Lane-packed layout: per-segment (width Dout) mean/var, computed on
            # the otherwise-idle MXU against a block-diagonal ones matrix.
            s = refs[idx][...]
            idx += 1
            mean = jnp.dot(y, s, precision=lax.Precision.HIGHEST,
                           preferred_element_type=jnp.float32) * inv_n
            c = y - mean
            var = jnp.dot(c * c, s, precision=lax.Precision.HIGHEST,
                          preferred_element_type=jnp.float32) * inv_n
        else:
            mean = jnp.mean(y, axis=-1, keepdims=True)
            c = y - mean
            var = jnp.mean(c * c, axis=-1, keepdims=True)

        o_ref[...] = (c * lax.rsqrt(var + LN_EPS) * g + b).astype(o_ref.dtype)

    return kernel


@functools.partial(jax.jit, static_argnames=("output_size", "trainable_add"))
def resample_norm(x, mask, ln_weight, ln_bias, *, output_size=None, trainable_add=True):
    """x: (B, T, Din) f32 -> (B, T, Dout) f32.  mask/ln_weight/ln_bias: (Dout,)."""
    B, T, Din = x.shape
    Dout = output_size or Din
    rows = B * T

    # --- lane-dense packing: k logical rows per physical row (free contiguous view).
    k = 1
    if Dout < _LANES:
        kc = _LANES // Dout
        if kc > 1 and rows % kc == 0:
            k = kc
    P_in, P_out = k * Din, k * Dout
    rows_p = rows // k
    x_flat = x.reshape(rows_p, P_in)

    # --- constants (f32); fold 2*sigmoid(mask) gate.
    if trainable_add:
        gate = 2.0 * jax.nn.sigmoid(mask.astype(jnp.float32))
    else:
        gate = jnp.ones((Dout,), jnp.float32)
    g_p = jnp.tile(ln_weight.astype(jnp.float32), k)
    b_p = jnp.tile(ln_bias.astype(jnp.float32), k)
    gate_p = jnp.tile(gate, k)

    with_matmul = Din != Dout
    segmented = k > 1

    # --- row tile: ~2 MiB per buffer, multiple of 8 rows, no host padding
    # (ragged last block has masked writes).  Keep >= 2 grid steps when possible
    # so v7x's two TensorCores both get work.  Double-buffered in+out stays
    # <= ~8 MiB, well under every generation's scoped VMEM limit.
    bytes_per_prow = 4 * max(P_in, P_out)
    tm = max(8, (_TILE_BYTES // bytes_per_prow) // 8 * 8)
    tm = min(tm, _round_up(rows_p, 8))
    if pl.cdiv(rows_p, tm) == 1 and rows_p > 8:
        tm = _round_up(pl.cdiv(rows_p, 2), 8)
    grid = (pl.cdiv(rows_p, tm),)

    operands = [x_flat]
    in_specs = [pl.BlockSpec((tm, P_in), lambda i: (i, 0))]
    if with_matmul:
        w = _make_interp_matrix(Din, Dout) * gate[None, :]          # fold gate into W
        if segmented:
            w = jnp.kron(jnp.eye(k, dtype=jnp.float32), w)          # block-diagonal (P_in, P_out)
        params = jnp.stack([g_p, b_p])                               # (2, P_out)
        operands += [w.astype(jnp.float32), params]
        in_specs += [pl.BlockSpec((P_in, P_out), lambda i: (0, 0)),
                     pl.BlockSpec((2, P_out), lambda i: (0, 0))]
    else:
        params = jnp.stack([gate_p, g_p, b_p])                       # (3, P_out)
        operands += [params]
        in_specs += [pl.BlockSpec((3, P_out), lambda i: (0, 0))]
    if segmented:
        seg = jnp.kron(jnp.eye(k, dtype=jnp.float32),
                       jnp.ones((Dout, Dout), jnp.float32))          # (P_out, P_out)
        operands += [seg]
        in_specs += [pl.BlockSpec((P_out, P_out), lambda i: (0, 0))]

    kernel = _make_kernel(with_matmul, segmented, 1.0 / Dout)
    out_flat = pl.pallas_call(
        kernel,
        out_shape=jax.ShapeDtypeStruct((rows_p, P_out), x.dtype),
        grid_spec=pltpu.PrefetchScalarGridSpec(
            num_scalar_prefetch=0,
            grid=grid,
            in_specs=in_specs,
            out_specs=pl.BlockSpec((tm, P_out), lambda i: (i, 0)),
        ),
        compiler_params=pltpu.CompilerParams(dimension_semantics=("parallel",)),
    )(*operands)

    return out_flat.reshape(B, T, Dout)


def resample_norm_ref(x, mask, ln_weight, ln_bias, *, output_size=None, trainable_add=True):
    """Pure-JAX reference mirroring the PyTorch forward."""
    B, T, Din = x.shape
    Dout = output_size or Din
    y = x
    if Din != Dout:
        w = _make_interp_matrix(Din, Dout)
        y = jnp.einsum("btd,de->bte", x, w, precision=lax.Precision.HIGHEST)
    if trainable_add:
        y = y * jax.nn.sigmoid(mask) * 2.0
    mean = jnp.mean(y, axis=-1, keepdims=True)
    var = jnp.mean((y - mean) ** 2, axis=-1, keepdims=True)
    y = (y - mean) / jnp.sqrt(var + LN_EPS)
    return y * ln_weight + ln_bias


if __name__ == "__main__":
    key = jax.random.PRNGKey(0)
    kx1, kx2, kx3, km, kg, kb = jax.random.split(key, 6)

    INPUT_SIZE, OUTPUT_SIZE = 24, 32
    mask = 0.1 * jax.random.normal(km, (OUTPUT_SIZE,), dtype=jnp.float32)
    ln_w = 1.0 + 0.05 * jax.random.normal(kg, (OUTPUT_SIZE,), dtype=jnp.float32)
    ln_b = 0.05 * jax.random.normal(kb, (OUTPUT_SIZE,), dtype=jnp.float32)

    # Path 1: resample (Din != Dout), lane-packed (k = 128 // 32 = 4).
    x1 = jax.random.normal(kx1, (2, 8, INPUT_SIZE), dtype=jnp.float32)
    out1 = jax.block_until_ready(resample_norm(x1, mask, ln_w, ln_b, output_size=OUTPUT_SIZE))
    ref1 = resample_norm_ref(x1, mask, ln_w, ln_b, output_size=OUTPUT_SIZE)
    assert out1.shape == (2, 8, OUTPUT_SIZE)
    assert jnp.allclose(out1, ref1, atol=1e-4, rtol=1e-4), "mismatch (resample, packed)"

    # Path 2: identity resample (Din == Dout), lane-packed, no interpolation matmul.
    x2 = jax.random.normal(kx2, (2, 8, OUTPUT_SIZE), dtype=jnp.float32)
    out2 = jax.block_until_ready(resample_norm(x2, mask, ln_w, ln_b, output_size=OUTPUT_SIZE))
    ref2 = resample_norm_ref(x2, mask, ln_w, ln_b, output_size=OUTPUT_SIZE)
    assert out2.shape == (2, 8, OUTPUT_SIZE)
    assert jnp.allclose(out2, ref2, atol=1e-4, rtol=1e-4), "mismatch (identity, packed)"

    # Path 3: ragged row count (no host pad, masked last block) + unpacked fallback.
    x3 = jax.random.normal(kx3, (3, 5, INPUT_SIZE), dtype=jnp.float32)
    out3 = jax.block_until_ready(resample_norm(x3, mask, ln_w, ln_b, output_size=OUTPUT_SIZE))
    ref3 = resample_norm_ref(x3, mask, ln_w, ln_b, output_size=OUTPUT_SIZE)
    assert out3.shape == (3, 5, OUTPUT_SIZE)
    assert jnp.allclose(out3, ref3, atol=1e-4, rtol=1e-4), "mismatch (ragged/unpacked)"

    print("KERNEL_OK")
</pallas_src>

<mosaic_0001>
module attributes {stable_mosaic.version = 11 : i64} {
  func.func @kernel(%arg0: i32, %arg1: memref<8x96xf32, #tpu.memory_space<vmem>>, %arg2: memref<96x128xf32, #tpu.memory_space<vmem>>, %arg3: memref<2x128xf32, #tpu.memory_space<vmem>>, %arg4: memref<128x128xf32, #tpu.memory_space<vmem>>, %arg5: memref<8x128xf32, #tpu.memory_space<vmem>>) attributes {dimension_semantics = [#tpu.dimension_semantics<parallel>], iteration_bounds = array<i64: 1>, scalar_prefetch = 0 : i64, scratch_operands = 0 : i64, tpu.core_type = #tpu.core_type<tc>, window_params = [{transform_indices = @transform_0, window_bounds = array<i64: 8, 96>}, {pipeline_mode = #tpu.pipeline_mode<synchronous>, transform_indices = @transform_1, window_bounds = array<i64: 96, 128>}, {pipeline_mode = #tpu.pipeline_mode<synchronous>, transform_indices = @transform_2, window_bounds = array<i64: 2, 128>}, {pipeline_mode = #tpu.pipeline_mode<synchronous>, transform_indices = @transform_3, window_bounds = array<i64: 128, 128>}, {transform_indices = @transform_4, window_bounds = array<i64: 8, 128>}]} {
    %c0 = arith.constant 0 : index
    %c0_0 = arith.constant 0 : index
    %0 = vector.load %arg1[%c0, %c0_0] : memref<8x96xf32, #tpu.memory_space<vmem>>, vector<8x96xf32>
    %c0_1 = arith.constant 0 : index
    %c0_2 = arith.constant 0 : index
    %1 = vector.load %arg2[%c0_1, %c0_2] : memref<96x128xf32, #tpu.memory_space<vmem>>, vector<96x128xf32>
    %cst = arith.constant dense<0.000000e+00> : vector<8x128xf32>
    %2 = tpu.matmul %0, %1, %cst {dimension_numbers = #tpu.dot_dimension_numbers<[1], [0], [0], [1], [0, 0, 1, 1], [], []>, precision = #tpu.contract_precision<fp32>} : vector<8x96xf32>, vector<96x128xf32>, vector<8x128xf32> -> vector<8x128xf32>
    %c0_3 = arith.constant 0 : index
    %c0_4 = arith.constant 0 : index
    %3 = vector.load %arg3[%c0_3, %c0_4] : memref<2x128xf32, #tpu.memory_space<vmem>>, vector<2x128xf32>
    %4 = vector.extract_strided_slice %3 {offsets = [0, 0], sizes = [1, 128], strides = [1, 1]} : vector<2x128xf32> to vector<1x128xf32>
    %5 = vector.extract_strided_slice %3 {offsets = [1, 0], sizes = [1, 128], strides = [1, 1]} : vector<2x128xf32> to vector<1x128xf32>
    %c0_5 = arith.constant 0 : index
    %c0_6 = arith.constant 0 : index
    %6 = vector.load %arg4[%c0_5, %c0_6] : memref<128x128xf32, #tpu.memory_space<vmem>>, vector<128x128xf32>
    %cst_7 = arith.constant dense<0.000000e+00> : vector<8x128xf32>
    %7 = tpu.matmul %2, %6, %cst_7 {dimension_numbers = #tpu.dot_dimension_numbers<[1], [0], [0], [1], [0, 0, 1, 1], [], []>, precision = #tpu.contract_precision<fp32>} : vector<8x128xf32>, vector<128x128xf32>, vector<8x128xf32> -> vector<8x128xf32>
    %cst_8 = arith.constant 3.125000e-02 : f32
    %8 = vector.broadcast %cst_8 : f32 to vector<8x128xf32>
    %9 = arith.mulf %7, %8 : vector<8x128xf32>
    %10 = arith.subf %2, %9 : vector<8x128xf32>
    %11 = arith.mulf %10, %10 : vector<8x128xf32>
    %cst_9 = arith.constant dense<0.000000e+00> : vector<8x128xf32>
    %12 = tpu.matmul %11, %6, %cst_9 {dimension_numbers = #tpu.dot_dimension_numbers<[1], [0], [0], [1], [0, 0, 1, 1], [], []>, precision = #tpu.contract_precision<fp32>} : vector<8x128xf32>, vector<128x128xf32>, vector<8x128xf32> -> vector<8x128xf32>
    %cst_10 = arith.constant 3.125000e-02 : f32
    %13 = vector.broadcast %cst_10 : f32 to vector<8x128xf32>
    %14 = arith.mulf %12, %13 : vector<8x128xf32>
    %cst_11 = arith.constant 9.99999974E-6 : f32
    %15 = vector.broadcast %cst_11 : f32 to vector<8x128xf32>
    %16 = arith.addf %14, %15 : vector<8x128xf32>
    %17 = math.rsqrt %16 : vector<8x128xf32>
    %18 = arith.mulf %10, %17 : vector<8x128xf32>
    %19 = vector.broadcast %4 : vector<1x128xf32> to vector<8x128xf32>
    %20 = arith.mulf %18, %19 : vector<8x128xf32>
    %21 = vector.broadcast %5 : vector<1x128xf32> to vector<8x128xf32>
    %22 = arith.addf %20, %21 : vector<8x128xf32>
    %c0_12 = arith.constant 0 : index
    %c0_13 = arith.constant 0 : index
    %23 = vector.load %arg5[%c0_12, %c0_13] : memref<8x128xf32, #tpu.memory_space<vmem>>, vector<8x128xf32>
    tpu.vector_store %arg5[%c0_12, %c0_13], %22 {strides = array<i32>} : memref<8x128xf32, #tpu.memory_space<vmem>>, vector<8x128xf32>,
    return
  }
  func.func @transform_0(%arg0: i32) -> (i32, i32) {
    %c0_i32 = arith.constant 0 : i32
    %c0_i32_0 = arith.constant 0 : i32
    return %arg0, %c0_i32 : i32, i32
  }
  func.func @transform_1(%arg0: i32) -> (i32, i32) {
    %c0_i32 = arith.constant 0 : i32
    %c0_i32_0 = arith.constant 0 : i32
    %c0_i32_1 = arith.constant 0 : i32
    return %c0_i32, %c0_i32_0 : i32, i32
  }
  func.func @transform_2(%arg0: i32) -> (i32, i32) {
    %c0_i32 = arith.constant 0 : i32
    %c0_i32_0 = arith.constant 0 : i32
    %c0_i32_1 = arith.constant 0 : i32
    return %c0_i32, %c0_i32_0 : i32, i32
  }
  func.func @transform_3(%arg0: i32) -> (i32, i32) {
    %c0_i32 = arith.constant 0 : i32
    %c0_i32_0 = arith.constant 0 : i32
    %c0_i32_1 = arith.constant 0 : i32
    return %c0_i32, %c0_i32_0 : i32, i32
  }
  func.func @transform_4(%arg0: i32) -> (i32, i32) {
    %c0_i32 = arith.constant 0 : i32
    %c0_i32_0 = arith.constant 0 : i32
    return %arg0, %c0_i32 : i32, i32
  }
}

</mosaic_0001>

<llo_original>
// kernel: tile.13
$region0: #{tile.13}
  #allocation0 [shape = 's32[1]{0}', space=sflag, size = 0x4, scoped, tag = 'scoped memory for tile.13']
  %s0 = inlined_call_operand.vmem [shape: f32[32], index: 0, kind: input, shape index: {}]
  %s1 = inlined_call_operand.vmem [shape: f32[4,32], index: 1, kind: output, shape index: {}]
  // Predicated region
  $region2: #{tile.13} parent=0 // pred_check
    _
  $region3: #{tile.13} parent=0 // pred_check_branch
    %3 = sbr.rel (0) target = $region5
  $region4: #{tile.13} parent=0 // pred_region
    _
  $region5: #{tile.13} parent=0 // pred_fallthru
    _
  %v4 = vld [vmem:[%s0] ss:$0 sm:$0xff]
  %5 = vst [vmem:[%s1] sm:$0xf] %v4

// kernel: tile.18
$region0: #{tile.18}
  %s0 = inlined_call_operand.vmem [shape: f32[4,32], index: 0, kind: input, shape index: {}]
  %s1 = inlined_call_operand.vmem [shape: f32[1,128], index: 1, kind: output, shape index: {}]
  $region1: #{tile.18} parent=0
    #allocation0 [shape = 'u8[4096]{0}', space=vmem, size = 0x1000, scoped, tag = 'scoped mem for output reshape']
    #allocation1 [shape = 'u8[4096]{0}', space=vmem, size = 0x1000, scoped, tag = 'scoped mem for input reshape']
    %s3 = sshllo.u32 0, 4
    %v4 = vld [vmem:[%s0] sm:%s3]
    %5 = vst [vmem:[#allocation1] sm:%s3] %v4
    %v6 = vld [vmem:[#allocation1] sm:$0x1]
    %vm7 = vcmask 261120
    %8 = vst.msk [vmem:[#allocation0] sm:$0x1] %vm7, %v6
    %s9 = scalar_lea.vmem [#allocation1], 3
    %v10 = vld [vmem:[%s9] sm:$0x1]
    %11 = vrot.lane.b32.xlu0 %v10, 96
    %v12 = vpop.permute.xlu0 %11
    %vm13 = vcmask 1048320
    %14 = vst.msk [vmem:[#allocation0] sm:$0x1] %vm13, %v12
    %s15 = scalar_lea.vmem [#allocation1], 2
    %v16 = vld [vmem:[%s15] sm:$0x1]
    %17 = vrot.lane.b32.xlu0 %v16, 64
    %v18 = vpop.permute.xlu0 %17
    %vm19 = vcmask 785920
    %20 = vst.msk [vmem:[#allocation0] sm:$0x1] %vm19, %v18
    %s21 = scalar_lea.vmem [#allocation1], 1
    %v22 = vld [vmem:[%s21] sm:$0x1]
    %23 = vrot.lane.b32.xlu0 %v22, 32
    %v24 = vpop.permute.xlu0 %23
    %vm25 = vcmask 523520
    %26 = vst.msk [vmem:[#allocation0] sm:$0x1] %vm25, %v24
    %s28 = sshllo.u32 0, 1
    %v30 = vld [vmem:[#allocation0] sm:%s28]
    %s31 = sshllo.u32 0, 1
    %32 = vst [vmem:[%s1] sm:%s31] %v30

// kernel: resample_norm.1
$region0: #{resample_norm.1}
  #allocation0 [shape = 'u32[]', space=smem, size = 0x4, offset = 0x4, fixed_abs, tag = 'smem constant byte address 0x4 - core index']
  #allocation1 [shape = 'u32[144,128]{1,0:T(1,128)}', space=vmem, size = 0x12000, scoped, tag = 'internal scratch']
  %s0 = inlined_call_operand.vmem [shape: f32[4,96], index: 0, kind: input, shape index: {}]
  %s1 = inlined_call_operand.vmem [shape: f32[96,128], index: 1, kind: input, shape index: {}]
  %s2 = inlined_call_operand.vmem [shape: f32[2,128], index: 2, kind: input, shape index: {}]
  %s3 = inlined_call_operand.vmem [shape: f32[128,128], index: 3, kind: input, shape index: {}]
  %s4 = inlined_call_operand.vmem [shape: f32[4,128], index: 4, kind: output, shape index: {}]
  %s5 = sld [smem:[#allocation0]]
  $region56: #{resample_norm.1} parent=0
    _
  %s7 = ssub.s32 1, %s5
  %s8 = scalar_select 0, %s7, %s5
  $region1: #{resample_norm.1} parent=0
    #allocation2 [shape = 'u8[4096]{0}', space=vmem, size = 0x1000, scoped, tag = 'output window, operand 0, single buffered']
    // Predicated region
    $region2: #{resample_norm.1} parent=1 // pred_check
      _
    $region3: #{resample_norm.1} parent=1 // pred_check_branch
      %10 = sbr.rel (0) target = $region5
    $region4: #{resample_norm.1} parent=1 // pred_region
      _
    $region5: #{resample_norm.1} parent=1 // pred_fallthru
      _
    // Predicated region
    $region6: #{resample_norm.1} parent=1 // pred_check
      _
    $region7: #{resample_norm.1} parent=1 // pred_check_branch
      %12 = sbr.rel (0) target = $region9
    $region8: #{resample_norm.1} parent=1 // pred_region
      _
    $region9: #{resample_norm.1} parent=1 // pred_fallthru
      _
    // Predicated region
    $region10: #{resample_norm.1} parent=1 // pred_check
      _
    $region11: #{resample_norm.1} parent=1 // pred_check_branch
      %14 = sbr.rel (0) target = $region13
    $region12: #{resample_norm.1} parent=1 // pred_region
      _
    $region13: #{resample_norm.1} parent=1 // pred_fallthru
      _
    // Predicated region
    $region14: #{resample_norm.1} parent=1 // pred_check
      _
    $region15: #{resample_norm.1} parent=1 // pred_check_branch
      %16 = sbr.rel (0) target = $region17
    $region16: #{resample_norm.1} parent=1 // pred_region
      _
    $region17: #{resample_norm.1} parent=1 // pred_fallthru
      _
    %v17 = vld [vmem:[%s0] sm:$0xff]
    %v18 = vld [vmem:[%s1] sm:$0xff]
    %v19 = vld [vmem:[%s1 + $0x8] sm:$0xff]
    %v20 = vld [vmem:[%s1 + $0x10] sm:$0xff]
    %v21 = vld [vmem:[%s1 + $0x18] sm:$0xff]
    %v22 = vld [vmem:[%s1 + $0x20] sm:$0xff]
    %v23 = vld [vmem:[%s1 + $0x28] sm:$0xff]
    %v24 = vld [vmem:[%s1 + $0x30] sm:$0xff]
    %v25 = vld [vmem:[%s1 + $0x38] sm:$0xff]
    %v26 = vld [vmem:[%s1 + $0x40] sm:$0xff]
    %v27 = vld [vmem:[%s1 + $0x48] sm:$0xff]
    %v28 = vld [vmem:[%s1 + $0x50] sm:$0xff]
    %v29 = vld [vmem:[%s1 + $0x58] sm:$0xff]
    %vm30 = vcmask 785408
    %v32 = vsel %vm30, %v17, 0
    %34 = vmatprep.subr.mxu0 0.0
    %v35 = vand.u32 %v18, 4294901760
    %36 = vmatpush1.msra.mxu0 %v35
    %37 = vmatprep.subr.mxu0 0.0
    %v38 = vand.u32 %v19, 4294901760
    %39 = vmatpush1.msra.mxu0 %v38
    %40 = vmatprep.subr.mxu0 0.0
    %v41 = vand.u32 %v20, 4294901760
    %42 = vmatpush1.msra.mxu0 %v41
    %43 = vmatprep.subr.mxu0 0.0
    %v44 = vand.u32 %v21, 4294901760
    %45 = vmatpush1.msra.mxu0 %v44
    %46 = vmatprep.subr.mxu0 0.0
    %v47 = vand.u32 %v22, 4294901760
    %48 = vmatpush1.msra.mxu0 %v47
    %49 = vmatprep.subr.mxu0 0.0
    %v50 = vand.u32 %v23, 4294901760
    %51 = vmatpush1.msra.mxu0 %v50
    %52 = vmatprep.subr.mxu0 0.0
    %v53 = vand.u32 %v24, 4294901760
    %54 = vmatpush1.msra.mxu0 %v53
    %55 = vmatprep.subr.mxu0 0.0
    %v56 = vand.u32 %v25, 4294901760
    %57 = vmatpush1.msra.mxu0 %v56
    %58 = vmatprep.subr.mxu0 0.0
    %v59 = vand.u32 %v26, 4294901760
    %60 = vmatpush1.msra.mxu0 %v59
    %61 = vmatprep.subr.mxu0 0.0
    %v62 = vand.u32 %v27, 4294901760
    %63 = vmatpush1.msra.mxu0 %v62
    %64 = vmatprep.subr.mxu0 0.0
    %v65 = vand.u32 %v28, 4294901760
    %66 = vmatpush1.msra.mxu0 %v65
    %67 = vmatprep.subr.mxu0 0.0
    %v68 = vand.u32 %v29, 4294901760
    %69 = vmatpush1.msra.mxu0 %v68
    %70 = vmatprep.subr.mxu0 0.0
    %71 = vmatpush1.msra.mxu0 0.0
    %72 = vmatprep.subr.mxu0 0.0
    %73 = vmatpush1.msra.mxu0 0.0
    %74 = vmatprep.subr.mxu0 0.0
    %75 = vmatpush1.msra.mxu0 0.0
    %76 = vmatprep.subr.mxu0 0.0
    %77 = vmatpush1.msra.mxu0 0.0
    %78 = vmatprep.subr.mxu0 0.0
    %79 = vmatpush1.msra.mxu0 0.0
    %80 = vmatprep.subr.mxu0 0.0
    %81 = vmatpush1.msra.mxu0 0.0
    %82 = vmatprep.subr.mxu0 0.0
    %83 = vmatpush1.msra.mxu0 0.0
    %84 = vmatprep.subr.mxu0 0.0
    %85 = vmatpush1.msra.mxu0 0.0
    %86 = vmatprep.subr.mxu0 0.0
    %87 = vmatpush1.msra.mxu0 0.0
    %88 = vmatprep.subr.mxu0 0.0
    %89 = vmatpush1.msra.mxu0 0.0
    %90 = vmatprep.subr.mxu0 0.0
    %91 = vmatpush1.msra.mxu0 0.0
    %92 = vmatprep.subr.mxu0 0.0
    %93 = vmatpush1.msra.mxu0 0.0
    %94 = vmatprep.subr.mxu0 0.0
    %95 = vmatpush1.msra.mxu0 0.0
    %96 = vmatprep.subr.mxu0 0.0
    %97 = vmatpush1.msra.mxu0 0.0
    %98 = vmatprep.subr.mxu0 0.0
    %99 = vmatpush1.msra.mxu0 0.0
    %100 = vmatprep.subr.mxu0 0.0
    %101 = vmatpush1.msra.mxu0 0.0
    %102 = vmatprep.subr.mxu0 0.0
    %103 = vmatpush1.msra.mxu0 0.0
    %104 = vmatprep.subr.mxu0 0.0
    %105 = vmatpush1.msra.mxu0 0.0
    %106 = vmatprep.subr.mxu0 0.0
    %107 = vmatpush1.msra.mxu0 0.0
    %108 = vmatprep.subr.mxu0 0.0
    %109 = vmatpush1.msra.mxu0 0.0
    %110 = vmatprep.mubr.f32.mxu0 0.0
    %v111 = vand.u32 %v32, 4294901760
    %v112 = vsub.f32 %v32, %v111
    %v113 = vand.u32 %v112, 4294901760
    %v114 = vsub.f32 %v112, %v113
    %v115 = vand.u32 %v114, 4294901760
    %116 = vmatmul.mubr.f32.gmra.mrb[0].mxu0 %v115
    %v117 = vpop.f32.mrb[0].mxu0
    %v118 = vadd.f32 0.0, %v117
    %v119 = vpop.f32.mrb[0].mxu0
    %120 = vdwg.mxu0
    %121 = vmatprep.subr.mxu0 0.0
    %v122 = vand.u32 %v18, 4294901760
    %v123 = vsub.f32 %v18, %v122
    %v124 = vand.u32 %v123, 4294901760
    %v125 = vsub.f32 %v123, %v124
    %v126 = vand.u32 %v125, 4294901760
    %127 = vmatpush1.msra.mxu0 %v126
    %128 = vmatprep.subr.mxu0 0.0
    %v129 = vand.u32 %v19, 4294901760
    %v130 = vsub.f32 %v19, %v129
    %v131 = vand.u32 %v130, 4294901760
    %v132 = vsub.f32 %v130, %v131
    %v133 = vand.u32 %v132, 4294901760
    %134 = vmatpush1.msra.mxu0 %v133
    %135 = vmatprep.subr.mxu0 0.0
    %v136 = vand.u32 %v20, 4294901760
    %v137 = vsub.f32 %v20, %v136
    %v138 = vand.u32 %v137, 4294901760
    %v139 = vsub.f32 %v137, %v138
    %v140 = vand.u32 %v139, 4294901760
    %141 = vmatpush1.msra.mxu0 %v140
    %142 = vmatprep.subr.mxu0 0.0
    %v143 = vand.u32 %v21, 4294901760
    %v144 = vsub.f32 %v21, %v143
    %v145 = vand.u32 %v144, 4294901760
    %v146 = vsub.f32 %v144, %v145
    %v147 = vand.u32 %v146, 4294901760
    %148 = vmatpush1.msra.mxu0 %v147
    %149 = vmatprep.subr.mxu0 0.0
    %v150 = vand.u32 %v22, 4294901760
    %v151 = vsub.f32 %v22, %v150
    %v152 = vand.u32 %v151, 4294901760
    %v153 = vsub.f32 %v151, %v152
    %v154 = vand.u32 %v153, 4294901760
    %155 = vmatpush1.msra.mxu0 %v154
    %156 = vmatprep.subr.mxu0 0.0
    %v157 = vand.u32 %v23, 4294901760
    %v158 = vsub.f32 %v23, %v157
    %v159 = vand.u32 %v158, 4294901760
    %v160 = vsub.f32 %v158, %v159
    %v161 = vand.u32 %v160, 4294901760
    %162 = vmatpush1.msra.mxu0 %v161
    %163 = vmatprep.subr.mxu0 0.0
    %v164 = vand.u32 %v24, 4294901760
    %v165 = vsub.f32 %v24, %v164
    %v166 = vand.u32 %v165, 4294901760
    %v167 = vsub.f32 %v165, %v166
    %v168 = vand.u32 %v167, 4294901760
    %169 = vmatpush1.msra.mxu0 %v168
    %170 = vmatprep.subr.mxu0 0.0
    %v171 = vand.u32 %v25, 4294901760
    %v172 = vsub.f32 %v25, %v171
    %v173 = vand.u32 %v172, 4294901760
    %v174 = vsub.f32 %v172, %v173
    %v175 = vand.u32 %v174, 4294901760
    %176 = vmatpush1.msra.mxu0 %v175
    %177 = vmatprep.subr.mxu0 0.0
    %v178 = vand.u32 %v26, 4294901760
    %v179 = vsub.f32 %v26, %v178
    %v180 = vand.u32 %v179, 4294901760
    %v181 = vsub.f32 %v179, %v180
    %v182 = vand.u32 %v181, 4294901760
    %183 = vmatpush1.msra.mxu0 %v182
    %184 = vmatprep.subr.mxu0 0.0
    %v185 = vand.u32 %v27, 4294901760
    %v186 = vsub.f32 %v27, %v185
    %v187 = vand.u32 %v186, 4294901760
    %v188 = vsub.f32 %v186, %v187
    %v189 = vand.u32 %v188, 4294901760
    %190 = vmatpush1.msra.mxu0 %v189
    %191 = vmatprep.subr.mxu0 0.0
    %v192 = vand.u32 %v28, 4294901760
    %v193 = vsub.f32 %v28, %v192
    %v194 = vand.u32 %v193, 4294901760
    %v195 = vsub.f32 %v193, %v194
    %v196 = vand.u32 %v195, 4294901760
    %197 = vmatpush1.msra.mxu0 %v196
    %198 = vmatprep.subr.mxu0 0.0
    %v199 = vand.u32 %v29, 4294901760
    %v200 = vsub.f32 %v29, %v199
    %v201 = vand.u32 %v200, 4294901760
    %v202 = vsub.f32 %v200, %v201
    %v203 = vand.u32 %v202, 4294901760
    %204 = vmatpush1.msra.mxu0 %v203
    %205 = vmatprep.subr.mxu0 0.0
    %206 = vmatpush1.msra.mxu0 0.0
    %207 = vmatprep.subr.mxu0 0.0
    %208 = vmatpush1.msra.mxu0 0.0
    %209 = vmatprep.subr.mxu0 0.0
    %210 = vmatpush1.msra.mxu0 0.0
    %211 = vmatprep.subr.mxu0 0.0
    %212 = vmatpush1.msra.mxu0 0.0
    %213 = vmatprep.subr.mxu0 0.0
    %214 = vmatpush1.msra.mxu0 0.0
    %215 = vmatprep.subr.mxu0 0.0
    %216 = vmatpush1.msra.mxu0 0.0
    %217 = vmatprep.subr.mxu0 0.0
    %218 = vmatpush1.msra.mxu0 0.0
    %219 = vmatprep.subr.mxu0 0.0
    %220 = vmatpush1.msra.mxu0 0.0
    %221 = vmatprep.subr.mxu0 0.0
    %222 = vmatpush1.msra.mxu0 0.0
    %223 = vmatprep.subr.mxu0 0.0
    %224 = vmatpush1.msra.mxu0 0.0
    %225 = vmatprep.subr.mxu0 0.0
    %226 = vmatpush1.msra.mxu0 0.0
    %227 = vmatprep.subr.mxu0 0.0
    %228 = vmatpush1.msra.mxu0 0.0
    %229 = vmatprep.subr.mxu0 0.0
    %230 = vmatpush1.msra.mxu0 0.0
    %231 = vmatprep.subr.mxu0 0.0
    %232 = vmatpush1.msra.mxu0 0.0
    %233 = vmatprep.subr.mxu0 0.0
    %234 = vmatpush1.msra.mxu0 0.0
    %235 = vmatprep.subr.mxu0 0.0
    %236 = vmatpush1.msra.mxu0 0.0
    %237 = vmatprep.subr.mxu0 0.0
    %238 = vmatpush1.msra.mxu0 0.0
    %239 = vmatprep.subr.mxu0 0.0
    %240 = vmatpush1.msra.mxu0 0.0
    %241 = vmatprep.subr.mxu0 0.0
    %242 = vmatpush1.msra.mxu0 0.0
    %243 = vmatprep.subr.mxu0 0.0
    %244 = vmatpush1.msra.mxu0 0.0
    %245 = vmatprep.mubr.f32.mxu0 0.0
    %v246 = vand.u32 %v32, 4294901760
    %247 = vmatmul.mubr.f32.gmra.mrb[0].mxu0 %v246
    %v248 = vpop.f32.mrb[0].mxu0
    %v249 = vadd.f32 %v118, %v248
    %v250 = vpop.f32.mrb[0].mxu0
    %251 = vdwg.mxu0
    %252 = vmatprep.subr.mxu0 0.0
    %v253 = vand.u32 %v18, 4294901760
    %v254 = vsub.f32 %v18, %v253
    %255 = vmatpush1.msra.mxu0 %v254
    %256 = vmatprep.subr.mxu0 0.0
    %v257 = vand.u32 %v19, 4294901760
    %v258 = vsub.f32 %v19, %v257
    %259 = vmatpush1.msra.mxu0 %v258
    %260 = vmatprep.subr.mxu0 0.0
    %v261 = vand.u32 %v20, 4294901760
    %v262 = vsub.f32 %v20, %v261
    %263 = vmatpush1.msra.mxu0 %v262
    %264 = vmatprep.subr.mxu0 0.0
    %v265 = vand.u32 %v21, 4294901760
    %v266 = vsub.f32 %v21, %v265
    %267 = vmatpush1.msra.mxu0 %v266
    %268 = vmatprep.subr.mxu0 0.0
    %v269 = vand.u32 %v22, 4294901760
    %v270 = vsub.f32 %v22, %v269
    %271 = vmatpush1.msra.mxu0 %v270
    %272 = vmatprep.subr.mxu0 0.0
    %v273 = vand.u32 %v23, 4294901760
    %v274 = vsub.f32 %v23, %v273
    %275 = vmatpush1.msra.mxu0 %v274
    %276 = vmatprep.subr.mxu0 0.0
    %v277 = vand.u32 %v24, 4294901760
    %v278 = vsub.f32 %v24, %v277
    %279 = vmatpush1.msra.mxu0 %v278
    %280 = vmatprep.subr.mxu0 0.0
    %v281 = vand.u32 %v25, 4294901760
    %v282 = vsub.f32 %v25, %v281
    %283 = vmatpush1.msra.mxu0 %v282
    %284 = vmatprep.subr.mxu0 0.0
    %v285 = vand.u32 %v26, 4294901760
    %v286 = vsub.f32 %v26, %v285
    %287 = vmatpush1.msra.mxu0 %v286
    %288 = vmatprep.subr.mxu0 0.0
    %v289 = vand.u32 %v27, 4294901760
    %v290 = vsub.f32 %v27, %v289
    %291 = vmatpush1.msra.mxu0 %v290
    %292 = vmatprep.subr.mxu0 0.0
    %v293 = vand.u32 %v28, 4294901760
    %v294 = vsub.f32 %v28, %v293
    %295 = vmatpush1.msra.mxu0 %v294
    %296 = vmatprep.subr.mxu0 0.0
    %v297 = vand.u32 %v29, 4294901760
    %v298 = vsub.f32 %v29, %v297
    %299 = vmatpush1.msra.mxu0 %v298
    %300 = vmatprep.subr.mxu0 0.0
    %301 = vmatpush1.msra.mxu0 0.0
    %302 = vmatprep.subr.mxu0 0.0
    %303 = vmatpush1.msra.mxu0 0.0
    %304 = vmatprep.subr.mxu0 0.0
    %305 = vmatpush1.msra.mxu0 0.0
    %306 = vmatprep.subr.mxu0 0.0
    %307 = vmatpush1.msra.mxu0 0.0
    %308 = vmatprep.subr.mxu0 0.0
    %309 = vmatpush1.msra.mxu0 0.0
    %310 = vmatprep.subr.mxu0 0.0
    %311 = vmatpush1.msra.mxu0 0.0
    %312 = vmatprep.subr.mxu0 0.0
    %313 = vmatpush1.msra.mxu0 0.0
    %314 = vmatprep.subr.mxu0 0.0
    %315 = vmatpush1.msra.mxu0 0.0
    %316 = vmatprep.subr.mxu0 0.0
    %317 = vmatpush1.msra.mxu0 0.0
    %318 = vmatprep.subr.mxu0 0.0
    %319 = vmatpush1.msra.mxu0 0.0
    %320 = vmatprep.subr.mxu0 0.0
    %321 = vmatpush1.msra.mxu0 0.0
    %322 = vmatprep.subr.mxu0 0.0
    %323 = vmatpush1.msra.mxu0 0.0
    %324 = vmatprep.subr.mxu0 0.0
    %325 = vmatpush1.msra.mxu0 0.0
    %326 = vmatprep.subr.mxu0 0.0
    %327 = vmatpush1.msra.mxu0 0.0
    %328 = vmatprep.subr.mxu0 0.0
    %329 = vmatpush1.msra.mxu0 0.0
    %330 = vmatprep.subr.mxu0 0.0
    %331 = vmatpush1.msra.mxu0 0.0
    %332 = vmatprep.subr.mxu0 0.0
    %333 = vmatpush1.msra.mxu0 0.0
    %334 = vmatprep.subr.mxu0 0.0
    %335 = vmatpush1.msra.mxu0 0.0
    %336 = vmatprep.subr.mxu0 0.0
    %337 = vmatpush1.msra.mxu0 0.0
    %338 = vmatprep.subr.mxu0 0.0
    %339 = vmatpush1.msra.mxu0 0.0
    %340 = vmatprep.mubr.f32.mxu0 0.0
    %v341 = vand.u32 %v32, 4294901760
    %v342 = vsub.f32 %v32, %v341
    %343 = vmatmul.mubr.f32.gmra.mrb[0].mxu0 %v342
    %v344 = vpop.f32.mrb[0].mxu0
    %v345 = vadd.f32 %v249, %v344
    %v346 = vpop.f32.mrb[0].mxu0
    %347 = vdwg.mxu0
    %348 = vmatprep.subr.mxu0 0.0
    %v349 = vand.u32 %v18, 4294901760
    %350 = vmatpush1.msra.mxu0 %v349
    %351 = vmatprep.subr.mxu0 0.0
    %v352 = vand.u32 %v19, 4294901760
    %353 = vmatpush1.msra.mxu0 %v352
    %354 = vmatprep.subr.mxu0 0.0
    %v355 = vand.u32 %v20, 4294901760
    %356 = vmatpush1.msra.mxu0 %v355
    %357 = vmatprep.subr.mxu0 0.0
    %v358 = vand.u32 %v21, 4294901760
    %359 = vmatpush1.msra.mxu0 %v358
    %360 = vmatprep.subr.mxu0 0.0
    %v361 = vand.u32 %v22, 4294901760
    %362 = vmatpush1.msra.mxu0 %v361
    %363 = vmatprep.subr.mxu0 0.0
    %v364 = vand.u32 %v23, 4294901760
    %365 = vmatpush1.msra.mxu0 %v364
    %366 = vmatprep.subr.mxu0 0.0
    %v367 = vand.u32 %v24, 4294901760
    %368 = vmatpush1.msra.mxu0 %v367
    %369 = vmatprep.subr.mxu0 0.0
    %v370 = vand.u32 %v25, 4294901760
    %371 = vmatpush1.msra.mxu0 %v370
    %372 = vmatprep.subr.mxu0 0.0
    %v373 = vand.u32 %v26, 4294901760
    %374 = vmatpush1.msra.mxu0 %v373
    %375 = vmatprep.subr.mxu0 0.0
    %v376 = vand.u32 %v27, 4294901760
    %377 = vmatpush1.msra.mxu0 %v376
    %378 = vmatprep.subr.mxu0 0.0
    %v379 = vand.u32 %v28, 4294901760
    %380 = vmatpush1.msra.mxu0 %v379
    %381 = vmatprep.subr.mxu0 0.0
    %v382 = vand.u32 %v29, 4294901760
    %383 = vmatpush1.msra.mxu0 %v382
    %384 = vmatprep.subr.mxu0 0.0
    %385 = vmatpush1.msra.mxu0 0.0
    %386 = vmatprep.subr.mxu0 0.0
    %387 = vmatpush1.msra.mxu0 0.0
    %388 = vmatprep.subr.mxu0 0.0
    %389 = vmatpush1.msra.mxu0 0.0
    %390 = vmatprep.subr.mxu0 0.0
    %391 = vmatpush1.msra.mxu0 0.0
    %392 = vmatprep.subr.mxu0 0.0
    %393 = vmatpush1.msra.mxu0 0.0
    %394 = vmatprep.subr.mxu0 0.0
    %395 = vmatpush1.msra.mxu0 0.0
    %396 = vmatprep.subr.mxu0 0.0
    %397 = vmatpush1.msra.mxu0 0.0
    %398 = vmatprep.subr.mxu0 0.0
    %399 = vmatpush1.msra.mxu0 0.0
    %400 = vmatprep.subr.mxu0 0.0
    %401 = vmatpush1.msra.mxu0 0.0
    %402 = vmatprep.subr.mxu0 0.0
    %403 = vmatpush1.msra.mxu0 0.0
    %404 = vmatprep.subr.mxu0 0.0
    %405 = vmatpush1.msra.mxu0 0.0
    %406 = vmatprep.subr.mxu0 0.0
    %407 = vmatpush1.msra.mxu0 0.0
    %408 = vmatprep.subr.mxu0 0.0
    %409 = vmatpush1.msra.mxu0 0.0
    %410 = vmatprep.subr.mxu0 0.0
    %411 = vmatpush1.msra.mxu0 0.0
    %412 = vmatprep.subr.mxu0 0.0
    %413 = vmatpush1.msra.mxu0 0.0
    %414 = vmatprep.subr.mxu0 0.0
    %415 = vmatpush1.msra.mxu0 0.0
    %416 = vmatprep.subr.mxu0 0.0
    %417 = vmatpush1.msra.mxu0 0.0
    %418 = vmatprep.subr.mxu0 0.0
    %419 = vmatpush1.msra.mxu0 0.0
    %420 = vmatprep.subr.mxu0 0.0
    %421 = vmatpush1.msra.mxu0 0.0
    %422 = vmatprep.subr.mxu0 0.0
    %423 = vmatpush1.msra.mxu0 0.0
    %424 = vmatprep.mubr.f32.mxu0 0.0
    %v425 = vand.u32 %v32, 4294901760
    %v426 = vsub.f32 %v32, %v425
    %v427 = vand.u32 %v426, 4294901760
    %428 = vmatmul.mubr.f32.gmra.mrb[0].mxu0 %v427
    %v429 = vpop.f32.mrb[0].mxu0
    %v430 = vadd.f32 %v345, %v429
    %v431 = vpop.f32.mrb[0].mxu0
    %432 = vdwg.mxu0
    %433 = vmatprep.subr.mxu0 0.0
    %v434 = vand.u32 %v18, 4294901760
    %v435 = vsub.f32 %v18, %v434
    %v436 = vand.u32 %v435, 4294901760
    %437 = vmatpush1.msra.mxu0 %v436
    %438 = vmatprep.subr.mxu0 0.0
    %v439 = vand.u32 %v19, 4294901760
    %v440 = vsub.f32 %v19, %v439
    %v441 = vand.u32 %v440, 4294901760
    %442 = vmatpush1.msra.mxu0 %v441
    %443 = vmatprep.subr.mxu0 0.0
    %v444 = vand.u32 %v20, 4294901760
    %v445 = vsub.f32 %v20, %v444
    %v446 = vand.u32 %v445, 4294901760
    %447 = vmatpush1.msra.mxu0 %v446
    %448 = vmatprep.subr.mxu0 0.0
    %v449 = vand.u32 %v21, 4294901760
    %v450 = vsub.f32 %v21, %v449
    %v451 = vand.u32 %v450, 4294901760
    %452 = vmatpush1.msra.mxu0 %v451
    %453 = vmatprep.subr.mxu0 0.0
    %v454 = vand.u32 %v22, 4294901760
    %v455 = vsub.f32 %v22, %v454
    %v456 = vand.u32 %v455, 4294901760
    %457 = vmatpush1.msra.mxu0 %v456
    %458 = vmatprep.subr.mxu0 0.0
    %v459 = vand.u32 %v23, 4294901760
    %v460 = vsub.f32 %v23, %v459
    %v461 = vand.u32 %v460, 4294901760
    %462 = vmatpush1.msra.mxu0 %v461
    %463 = vmatprep.subr.mxu0 0.0
    %v464 = vand.u32 %v24, 4294901760
    %v465 = vsub.f32 %v24, %v464
    %v466 = vand.u32 %v465, 4294901760
    %467 = vmatpush1.msra.mxu0 %v466
    %468 = vmatprep.subr.mxu0 0.0
    %v469 = vand.u32 %v25, 4294901760
    %v470 = vsub.f32 %v25, %v469
    %v471 = vand.u32 %v470, 4294901760
    %472 = vmatpush1.msra.mxu0 %v471
    %473 = vmatprep.subr.mxu0 0.0
    %v474 = vand.u32 %v26, 4294901760
    %v475 = vsub.f32 %v26, %v474
    %v476 = vand.u32 %v475, 4294901760
    %477 = vmatpush1.msra.mxu0 %v476
    %478 = vmatprep.subr.mxu0 0.0
    %v479 = vand.u32 %v27, 4294901760
    %v480 = vsub.f32 %v27, %v479
    %v481 = vand.u32 %v480, 4294901760
    %482 = vmatpush1.msra.mxu0 %v481
    %483 = vmatprep.subr.mxu0 0.0
    %v484 = vand.u32 %v28, 4294901760
    %v485 = vsub.f32 %v28, %v484
    %v486 = vand.u32 %v485, 4294901760
    %487 = vmatpush1.msra.mxu0 %v486
    %488 = vmatprep.subr.mxu0 0.0
    %v489 = vand.u32 %v29, 4294901760
    %v490 = vsub.f32 %v29, %v489
    %v491 = vand.u32 %v490, 4294901760
    %492 = vmatpush1.msra.mxu0 %v491
    %493 = vmatprep.subr.mxu0 0.0
    %494 = vmatpush1.msra.mxu0 0.0
    %495 = vmatprep.subr.mxu0 0.0
    %496 = vmatpush1.msra.mxu0 0.0
    %497 = vmatprep.subr.mxu0 0.0
    %498 = vmatpush1.msra.mxu0 0.0
    %499 = vmatprep.subr.mxu0 0.0
    %500 = vmatpush1.msra.mxu0 0.0
    %501 = vmatprep.subr.mxu0 0.0
    %502 = vmatpush1.msra.mxu0 0.0
    %503 = vmatprep.subr.mxu0 0.0
    %504 = vmatpush1.msra.mxu0 0.0
    %505 = vmatprep.subr.mxu0 0.0
    %506 = vmatpush1.msra.mxu0 0.0
    %507 = vmatprep.subr.mxu0 0.0
    %508 = vmatpush1.msra.mxu0 0.0
    %509 = vmatprep.subr.mxu0 0.0
    %510 = vmatpush1.msra.mxu0 0.0
    %511 = vmatprep.subr.mxu0 0.0
    %512 = vmatpush1.msra.mxu0 0.0
    %513 = vmatprep.subr.mxu0 0.0
    %514 = vmatpush1.msra.mxu0 0.0
    %515 = vmatprep.subr.mxu0 0.0
    %516 = vmatpush1.msra.mxu0 0.0
    %517 = vmatprep.subr.mxu0 0.0
    %518 = vmatpush1.msra.mxu0 0.0
    %519 = vmatprep.subr.mxu0 0.0
    %520 = vmatpush1.msra.mxu0 0.0
    %521 = vmatprep.subr.mxu0 0.0
    %522 = vmatpush1.msra.mxu0 0.0
    %523 = vmatprep.subr.mxu0 0.0
    %524 = vmatpush1.msra.mxu0 0.0
    %525 = vmatprep.subr.mxu0 0.0
    %526 = vmatpush1.msra.mxu0 0.0
    %527 = vmatprep.subr.mxu0 0.0
    %528 = vmatpush1.msra.mxu0 0.0
    %529 = vmatprep.subr.mxu0 0.0
    %530 = vmatpush1.msra.mxu0 0.0
    %531 = vmatprep.subr.mxu0 0.0
    %532 = vmatpush1.msra.mxu0 0.0
    %533 = vmatprep.mubr.f32.mxu0 0.0
    %v534 = vand.u32 %v32, 4294901760
    %535 = vmatmul.mubr.f32.gmra.mrb[0].mxu0 %v534
    %v536 = vpop.f32.mrb[0].mxu0
    %v537 = vadd.f32 %v430, %v536
    %v538 = vpop.f32.mrb[0].mxu0
    %539 = vdwg.mxu0
    %540 = vmatprep.subr.mxu0 0.0
    %v541 = vand.u32 %v18, 4294901760
    %542 = vmatpush1.msra.mxu0 %v541
    %543 = vmatprep.subr.mxu0 0.0
    %v544 = vand.u32 %v19, 4294901760
    %545 = vmatpush1.msra.mxu0 %v544
    %546 = vmatprep.subr.mxu0 0.0
    %v547 = vand.u32 %v20, 4294901760
    %548 = vmatpush1.msra.mxu0 %v547
    %549 = vmatprep.subr.mxu0 0.0
    %v550 = vand.u32 %v21, 4294901760
    %551 = vmatpush1.msra.mxu0 %v550
    %552 = vmatprep.subr.mxu0 0.0
    %v553 = vand.u32 %v22, 4294901760
    %554 = vmatpush1.msra.mxu0 %v553
    %555 = vmatprep.subr.mxu0 0.0
    %v556 = vand.u32 %v23, 4294901760
    %557 = vmatpush1.msra.mxu0 %v556
    %558 = vmatprep.subr.mxu0 0.0
    %v559 = vand.u32 %v24, 4294901760
    %560 = vmatpush1.msra.mxu0 %v559
    %561 = vmatprep.subr.mxu0 0.0
    %v562 = vand.u32 %v25, 4294901760
    %563 = vmatpush1.msra.mxu0 %v562
    %564 = vmatprep.subr.mxu0 0.0
    %v565 = vand.u32 %v26, 4294901760
    %566 = vmatpush1.msra.mxu0 %v565
    %567 = vmatprep.subr.mxu0 0.0
    %v568 = vand.u32 %v27, 4294901760
    %569 = vmatpush1.msra.mxu0 %v568
    %570 = vmatprep.subr.mxu0 0.0
    %v571 = vand.u32 %v28, 4294901760
    %572 = vmatpush1.msra.mxu0 %v571
    %573 = vmatprep.subr.mxu0 0.0
    %v574 = vand.u32 %v29, 4294901760
    %575 = vmatpush1.msra.mxu0 %v574
    %576 = vmatprep.subr.mxu0 0.0
    %577 = vmatpush1.msra.mxu0 0.0
    %578 = vmatprep.subr.mxu0 0.0
    %579 = vmatpush1.msra.mxu0 0.0
    %580 = vmatprep.subr.mxu0 0.0
    %581 = vmatpush1.msra.mxu0 0.0
    %582 = vmatprep.subr.mxu0 0.0
    %583 = vmatpush1.msra.mxu0 0.0
    %584 = vmatprep.subr.mxu0 0.0
    %585 = vmatpush1.msra.mxu0 0.0
    %586 = vmatprep.subr.mxu0 0.0
    %587 = vmatpush1.msra.mxu0 0.0
    %588 = vmatprep.subr.mxu0 0.0
    %589 = vmatpush1.msra.mxu0 0.0
    %590 = vmatprep.subr.mxu0 0.0
    %591 = vmatpush1.msra.mxu0 0.0
    %592 = vmatprep.subr.mxu0 0.0
    %593 = vmatpush1.msra.mxu0 0.0
    %594 = vmatprep.subr.mxu0 0.0
    %595 = vmatpush1.msra.mxu0 0.0
    %596 = vmatprep.subr.mxu0 0.0
    %597 = vmatpush1.msra.mxu0 0.0
    %598 = vmatprep.subr.mxu0 0.0
    %599 = vmatpush1.msra.mxu0 0.0
    %600 = vmatprep.subr.mxu0 0.0
    %601 = vmatpush1.msra.mxu0 0.0
    %602 = vmatprep.subr.mxu0 0.0
    %603 = vmatpush1.msra.mxu0 0.0
    %604 = vmatprep.subr.mxu0 0.0
    %605 = vmatpush1.msra.mxu0 0.0
    %606 = vmatprep.subr.mxu0 0.0
    %607 = vmatpush1.msra.mxu0 0.0
    %608 = vmatprep.subr.mxu0 0.0
    %609 = vmatpush1.msra.mxu0 0.0
    %610 = vmatprep.subr.mxu0 0.0
    %611 = vmatpush1.msra.mxu0 0.0
    %612 = vmatprep.subr.mxu0 0.0
    %613 = vmatpush1.msra.mxu0 0.0
    %614 = vmatprep.subr.mxu0 0.0
    %615 = vmatpush1.msra.mxu0 0.0
    %616 = vmatprep.mubr.f32.mxu0 0.0
    %v617 = vand.u32 %v32, 4294901760
    %618 = vmatmul.mubr.f32.gmra.mrb[0].mxu0 %v617
    %v619 = vpop.f32.mrb[0].mxu0
    %v620 = vadd.f32 %v537, %v619
    %v621 = vpop.f32.mrb[0].mxu0
    %622 = vdwg.mxu0
    %v623 = vld [vmem:[%s2] sm:$0x3]
    %v624 = vld [vmem:[%s3] sm:$0xff]
    %v625 = vld [vmem:[%s3 + $0x8] sm:$0xff]
    %v626 = vld [vmem:[%s3 + $0x10] sm:$0xff]
    %v627 = vld [vmem:[%s3 + $0x18] sm:$0xff]
    %v628 = vld [vmem:[%s3 + $0x20] sm:$0xff]
    %v629 = vld [vmem:[%s3 + $0x28] sm:$0xff]
    %v630 = vld [vmem:[%s3 + $0x30] sm:$0xff]
    %v631 = vld [vmem:[%s3 + $0x38] sm:$0xff]
    %v632 = vld [vmem:[%s3 + $0x40] sm:$0xff]
    %v633 = vld [vmem:[%s3 + $0x48] sm:$0xff]
    %v634 = vld [vmem:[%s3 + $0x50] sm:$0xff]
    %v635 = vld [vmem:[%s3 + $0x58] sm:$0xff]
    %v636 = vld [vmem:[%s3 + $0x60] sm:$0xff]
    %v637 = vld [vmem:[%s3 + $0x68] sm:$0xff]
    %v638 = vld [vmem:[%s3 + $0x70] sm:$0xff]
    %v639 = vld [vmem:[%s3 + $0x78] sm:$0xff]
    %640 = vmatprep.subr.mxu0 0.0
    %v641 = vand.u32 %v624, 4294901760
    %642 = vmatpush1.msra.mxu0 %v641
    %643 = vmatprep.subr.mxu0 0.0
    %v644 = vand.u32 %v625, 4294901760
    %645 = vmatpush1.msra.mxu0 %v644
    %646 = vmatprep.subr.mxu0 0.0
    %v647 = vand.u32 %v626, 4294901760
    %648 = vmatpush1.msra.mxu0 %v647
    %649 = vmatprep.subr.mxu0 0.0
    %v650 = vand.u32 %v627, 4294901760
    %651 = vmatpush1.msra.mxu0 %v650
    %652 = vmatprep.subr.mxu0 0.0
    %v653 = vand.u32 %v628, 4294901760
    %654 = vmatpush1.msra.mxu0 %v653
    %655 = vmatprep.subr.mxu0 0.0
    %v656 = vand.u32 %v629, 4294901760
    %657 = vmatpush1.msra.mxu0 %v656
    %658 = vmatprep.subr.mxu0 0.0
    %v659 = vand.u32 %v630, 4294901760
    %660 = vmatpush1.msra.mxu0 %v659
    %661 = vmatprep.subr.mxu0 0.0
    %v662 = vand.u32 %v631, 4294901760
    %663 = vmatpush1.msra.mxu0 %v662
    %664 = vmatprep.subr.mxu0 0.0
    %v665 = vand.u32 %v632, 4294901760
    %666 = vmatpush1.msra.mxu0 %v665
    %667 = vmatprep.subr.mxu0 0.0
    %v668 = vand.u32 %v633, 4294901760
    %669 = vmatpush1.msra.mxu0 %v668
    %670 = vmatprep.subr.mxu0 0.0
    %v671 = vand.u32 %v634, 4294901760
    %672 = vmatpush1.msra.mxu0 %v671
    %673 = vmatprep.subr.mxu0 0.0
    %v674 = vand.u32 %v635, 4294901760
    %675 = vmatpush1.msra.mxu0 %v674
    %676 = vmatprep.subr.mxu0 0.0
    %v677 = vand.u32 %v636, 4294901760
    %678 = vmatpush1.msra.mxu0 %v677
    %679 = vmatprep.subr.mxu0 0.0
    %v680 = vand.u32 %v637, 4294901760
    %681 = vmatpush1.msra.mxu0 %v680
    %682 = vmatprep.subr.mxu0 0.0
    %v683 = vand.u32 %v638, 4294901760
    %684 = vmatpush1.msra.mxu0 %v683
    %685 = vmatprep.subr.mxu0 0.0
    %v686 = vand.u32 %v639, 4294901760
    %687 = vmatpush1.msra.mxu0 %v686
    %688 = vmatprep.subr.mxu0 0.0
    %689 = vmatpush1.msra.mxu0 0.0
    %690 = vmatprep.subr.mxu0 0.0
    %691 = vmatpush1.msra.mxu0 0.0
    %692 = vmatprep.subr.mxu0 0.0
    %693 = vmatpush1.msra.mxu0 0.0
    %694 = vmatprep.subr.mxu0 0.0
    %695 = vmatpush1.msra.mxu0 0.0
    %696 = vmatprep.subr.mxu0 0.0
    %697 = vmatpush1.msra.mxu0 0.0
    %698 = vmatprep.subr.mxu0 0.0
    %699 = vmatpush1.msra.mxu0 0.0
    %700 = vmatprep.subr.mxu0 0.0
    %701 = vmatpush1.msra.mxu0 0.0
    %702 = vmatprep.subr.mxu0 0.0
    %703 = vmatpush1.msra.mxu0 0.0
    %704 = vmatprep.subr.mxu0 0.0
    %705 = vmatpush1.msra.mxu0 0.0
    %706 = vmatprep.subr.mxu0 0.0
    %707 = vmatpush1.msra.mxu0 0.0
    %708 = vmatprep.subr.mxu0 0.0
    %709 = vmatpush1.msra.mxu0 0.0
    %710 = vmatprep.subr.mxu0 0.0
    %711 = vmatpush1.msra.mxu0 0.0
    %712 = vmatprep.subr.mxu0 0.0
    %713 = vmatpush1.msra.mxu0 0.0
    %714 = vmatprep.subr.mxu0 0.0
    %715 = vmatpush1.msra.mxu0 0.0
    %716 = vmatprep.subr.mxu0 0.0
    %717 = vmatpush1.msra.mxu0 0.0
    %718 = vmatprep.subr.mxu0 0.0
    %719 = vmatpush1.msra.mxu0 0.0
    %720 = vmatprep.mubr.f32.mxu0 0.0
    %v721 = vand.u32 %v620, 4294901760
    %v722 = vsub.f32 %v620, %v721
    %v723 = vand.u32 %v722, 4294901760
    %v724 = vsub.f32 %v722, %v723
    %v725 = vand.u32 %v724, 4294901760
    %726 = vmatmul.mubr.f32.gmra.mrb[0].mxu0 %v725
    %v727 = vpop.f32.mrb[0].mxu0
    %v728 = vadd.f32 0.0, %v727
    %v729 = vpop.f32.mrb[0].mxu0
    %730 = vdwg.mxu0
    %731 = vmatprep.subr.mxu0 0.0
    %v732 = vand.u32 %v624, 4294901760
    %v733 = vsub.f32 %v624, %v732
    %v734 = vand.u32 %v733, 4294901760
    %v735 = vsub.f32 %v733, %v734
    %v736 = vand.u32 %v735, 4294901760
    %737 = vmatpush1.msra.mxu0 %v736
    %738 = vmatprep.subr.mxu0 0.0
    %v739 = vand.u32 %v625, 4294901760
    %v740 = vsub.f32 %v625, %v739
    %v741 = vand.u32 %v740, 4294901760
    %v742 = vsub.f32 %v740, %v741
    %v743 = vand.u32 %v742, 4294901760
    %744 = vmatpush1.msra.mxu0 %v743
    %745 = vmatprep.subr.mxu0 0.0
    %v746 = vand.u32 %v626, 4294901760
    %v747 = vsub.f32 %v626, %v746
    %v748 = vand.u32 %v747, 4294901760
    %v749 = vsub.f32 %v747, %v748
    %v750 = vand.u32 %v749, 4294901760
    %751 = vmatpush1.msra.mxu0 %v750
    %752 = vmatprep.subr.mxu0 0.0
    %v753 = vand.u32 %v627, 4294901760
    %v754 = vsub.f32 %v627, %v753
    %v755 = vand.u32 %v754, 4294901760
    %v756 = vsub.f32 %v754, %v755
    %v757 = vand.u32 %v756, 4294901760
    %758 = vmatpush1.msra.mxu0 %v757
    %759 = vmatprep.subr.mxu0 0.0
    %v760 = vand.u32 %v628, 4294901760
    %v761 = vsub.f32 %v628, %v760
    %v762 = vand.u32 %v761, 4294901760
    %v763 = vsub.f32 %v761, %v762
    %v764 = vand.u32 %v763, 4294901760
    %765 = vmatpush1.msra.mxu0 %v764
    %766 = vmatprep.subr.mxu0 0.0
    %v767 = vand.u32 %v629, 4294901760
    %v768 = vsub.f32 %v629, %v767
    %v769 = vand.u32 %v768, 4294901760
    %v770 = vsub.f32 %v768, %v769
    %v771 = vand.u32 %v770, 4294901760
    %772 = vmatpush1.msra.mxu0 %v771
    %773 = vmatprep.subr.mxu0 0.0
    %v774 = vand.u32 %v630, 4294901760
    %v775 = vsub.f32 %v630, %v774
    %v776 = vand.u32 %v775, 4294901760
    %v777 = vsub.f32 %v775, %v776
    %v778 = vand.u32 %v777, 4294901760
    %779 = vmatpush1.msra.mxu0 %v778
    %780 = vmatprep.subr.mxu0 0.0
    %v781 = vand.u32 %v631, 4294901760
    %v782 = vsub.f32 %v631, %v781
    %v783 = vand.u32 %v782, 4294901760
    %v784 = vsub.f32 %v782, %v783
    %v785 = vand.u32 %v784, 4294901760
    %786 = vmatpush1.msra.mxu0 %v785
    %787 = vmatprep.subr.mxu0 0.0
    %v788 = vand.u32 %v632, 4294901760
    %v789 = vsub.f32 %v632, %v788
    %v790 = vand.u32 %v789, 4294901760
    %v791 = vsub.f32 %v789, %v790
    %v792 = vand.u32 %v791, 4294901760
    %793 = vmatpush1.msra.mxu0 %v792
    %794 = vmatprep.subr.mxu0 0.0
    %v795 = vand.u32 %v633, 4294901760
    %v796 = vsub.f32 %v633, %v795
    %v797 = vand.u32 %v796, 4294901760
    %v798 = vsub.f32 %v796, %v797
    %v799 = vand.u32 %v798, 4294901760
    %800 = vmatpush1.msra.mxu0 %v799
    %801 = vmatprep.subr.mxu0 0.0
    %v802 = vand.u32 %v634, 4294901760
    %v803 = vsub.f32 %v634, %v802
    %v804 = vand.u32 %v803, 4294901760
    %v805 = vsub.f32 %v803, %v804
    %v806 = vand.u32 %v805, 4294901760
    %807 = vmatpush1.msra.mxu0 %v806
    %808 = vmatprep.subr.mxu0 0.0
    %v809 = vand.u32 %v635, 4294901760
    %v810 = vsub.f32 %v635, %v809
    %v811 = vand.u32 %v810, 4294901760
    %v812 = vsub.f32 %v810, %v811
    %v813 = vand.u32 %v812, 4294901760
    %814 = vmatpush1.msra.mxu0 %v813
    %815 = vmatprep.subr.mxu0 0.0
    %v816 = vand.u32 %v636, 4294901760
    %v817 = vsub.f32 %v636, %v816
    %v818 = vand.u32 %v817, 4294901760
    %v819 = vsub.f32 %v817, %v818
    %v820 = vand.u32 %v819, 4294901760
    %821 = vmatpush1.msra.mxu0 %v820
    %822 = vmatprep.subr.mxu0 0.0
    %v823 = vand.u32 %v637, 4294901760
    %v824 = vsub.f32 %v637, %v823
    %v825 = vand.u32 %v824, 4294901760
    %v826 = vsub.f32 %v824, %v825
    %v827 = vand.u32 %v826, 4294901760
    %828 = vmatpush1.msra.mxu0 %v827
    %829 = vmatprep.subr.mxu0 0.0
    %v830 = vand.u32 %v638, 4294901760
    %v831 = vsub.f32 %v638, %v830
    %v832 = vand.u32 %v831, 4294901760
    %v833 = vsub.f32 %v831, %v832
    %v834 = vand.u32 %v833, 4294901760
    %835 = vmatpush1.msra.mxu0 %v834
    %836 = vmatprep.subr.mxu0 0.0
    %v837 = vand.u32 %v639, 4294901760
    %v838 = vsub.f32 %v639, %v837
    %v839 = vand.u32 %v838, 4294901760
    %v840 = vsub.f32 %v838, %v839
    %v841 = vand.u32 %v840, 4294901760
    %842 = vmatpush1.msra.mxu0 %v841
    %843 = vmatprep.subr.mxu0 0.0
    %844 = vmatpush1.msra.mxu0 0.0
    %845 = vmatprep.subr.mxu0 0.0
    %846 = vmatpush1.msra.mxu0 0.0
    %847 = vmatprep.subr.mxu0 0.0
    %848 = vmatpush1.msra.mxu0 0.0
    %849 = vmatprep.subr.mxu0 0.0
    %850 = vmatpush1.msra.mxu0 0.0
    %851 = vmatprep.subr.mxu0 0.0
    %852 = vmatpush1.msra.mxu0 0.0
    %853 = vmatprep.subr.mxu0 0.0
    %854 = vmatpush1.msra.mxu0 0.0
    %855 = vmatprep.subr.mxu0 0.0
    %856 = vmatpush1.msra.mxu0 0.0
    %857 = vmatprep.subr.mxu0 0.0
    %858 = vmatpush1.msra.mxu0 0.0
    %859 = vmatprep.subr.mxu0 0.0
    %860 = vmatpush1.msra.mxu0 0.0
    %861 = vmatprep.subr.mxu0 0.0
    %862 = vmatpush1.msra.mxu0 0.0
    %863 = vmatprep.subr.mxu0 0.0
    %864 = vmatpush1.msra.mxu0 0.0
    %865 = vmatprep.subr.mxu0 0.0
    %866 = vmatpush1.msra.mxu0 0.0
    %867 = vmatprep.subr.mxu0 0.0
    %868 = vmatpush1.msra.mxu0 0.0
    %869 = vmatprep.subr.mxu0 0.0
    %870 = vmatpush1.msra.mxu0 0.0
    %871 = vmatprep.subr.mxu0 0.0
    %872 = vmatpush1.msra.mxu0 0.0
    %873 = vmatprep.subr.mxu0 0.0
    %874 = vmatpush1.msra.mxu0 0.0
    %875 = vmatprep.mubr.f32.mxu0 0.0
    %v876 = vand.u32 %v620, 4294901760
    %877 = vmatmul.mubr.f32.gmra.mrb[0].mxu0 %v876
    %v878 = vpop.f32.mrb[0].mxu0
    %v879 = vadd.f32 %v728, %v878
    %v880 = vpop.f32.mrb[0].mxu0
    %881 = vdwg.mxu0
    %882 = vmatprep.subr.mxu0 0.0
    %v883 = vand.u32 %v624, 4294901760
    %v884 = vsub.f32 %v624, %v883
    %885 = vmatpush1.msra.mxu0 %v884
    %886 = vmatprep.subr.mxu0 0.0
    %v887 = vand.u32 %v625, 4294901760
    %v888 = vsub.f32 %v625, %v887
    %889 = vmatpush1.msra.mxu0 %v888
    %890 = vmatprep.subr.mxu0 0.0
    %v891 = vand.u32 %v626, 4294901760
    %v892 = vsub.f32 %v626, %v891
    %893 = vmatpush1.msra.mxu0 %v892
    %894 = vmatprep.subr.mxu0 0.0
    %v895 = vand.u32 %v627, 4294901760
    %v896 = vsub.f32 %v627, %v895
    %897 = vmatpush1.msra.mxu0 %v896
    %898 = vmatprep.subr.mxu0 0.0
    %v899 = vand.u32 %v628, 4294901760
    %v900 = vsub.f32 %v628, %v899
    %901 = vmatpush1.msra.mxu0 %v900
    %902 = vmatprep.subr.mxu0 0.0
    %v903 = vand.u32 %v629, 4294901760
    %v904 = vsub.f32 %v629, %v903
    %905 = vmatpush1.msra.mxu0 %v904
    %906 = vmatprep.subr.mxu0 0.0
    %v907 = vand.u32 %v630, 4294901760
    %v908 = vsub.f32 %v630, %v907
    %909 = vmatpush1.msra.mxu0 %v908
    %910 = vmatprep.subr.mxu0 0.0
    %v911 = vand.u32 %v631, 4294901760
    %v912 = vsub.f32 %v631, %v911
    %913 = vmatpush1.msra.mxu0 %v912
    %914 = vmatprep.subr.mxu0 0.0
    %v915 = vand.u32 %v632, 4294901760
    %v916 = vsub.f32 %v632, %v915
    %917 = vmatpush1.msra.mxu0 %v916
    %918 = vmatprep.subr.mxu0 0.0
    %v919 = vand.u32 %v633, 4294901760
    %v920 = vsub.f32 %v633, %v919
    %921 = vmatpush1.msra.mxu0 %v920
    %922 = vmatprep.subr.mxu0 0.0
    %v923 = vand.u32 %v634, 4294901760
    %v924 = vsub.f32 %v634, %v923
    %925 = vmatpush1.msra.mxu0 %v924
    %926 = vmatprep.subr.mxu0 0.0
    %v927 = vand.u32 %v635, 4294901760
    %v928 = vsub.f32 %v635, %v927
    %929 = vmatpush1.msra.mxu0 %v928
    %930 = vmatprep.subr.mxu0 0.0
    %v931 = vand.u32 %v636, 4294901760
    %v932 = vsub.f32 %v636, %v931
    %933 = vmatpush1.msra.mxu0 %v932
    %934 = vmatprep.subr.mxu0 0.0
    %v935 = vand.u32 %v637, 4294901760
    %v936 = vsub.f32 %v637, %v935
    %937 = vmatpush1.msra.mxu0 %v936
    %938 = vmatprep.subr.mxu0 0.0
    %v939 = vand.u32 %v638, 4294901760
    %v940 = vsub.f32 %v638, %v939
    %941 = vmatpush1.msra.mxu0 %v940
    %942 = vmatprep.subr.mxu0 0.0
    %v943 = vand.u32 %v639, 4294901760
    %v944 = vsub.f32 %v639, %v943
    %945 = vmatpush1.msra.mxu0 %v944
    %946 = vmatprep.subr.mxu0 0.0
    %947 = vmatpush1.msra.mxu0 0.0
    %948 = vmatprep.subr.mxu0 0.0
    %949 = vmatpush1.msra.mxu0 0.0
    %950 = vmatprep.subr.mxu0 0.0
    %951 = vmatpush1.msra.mxu0 0.0
    %952 = vmatprep.subr.mxu0 0.0
    %953 = vmatpush1.msra.mxu0 0.0
    %954 = vmatprep.subr.mxu0 0.0
    %955 = vmatpush1.msra.mxu0 0.0
    %956 = vmatprep.subr.mxu0 0.0
    %957 = vmatpush1.msra.mxu0 0.0
    %958 = vmatprep.subr.mxu0 0.0
    %959 = vmatpush1.msra.mxu0 0.0
    %960 = vmatprep.subr.mxu0 0.0
    %961 = vmatpush1.msra.mxu0 0.0
    %962 = vmatprep.subr.mxu0 0.0
    %963 = vmatpush1.msra.mxu0 0.0
    %964 = vmatprep.subr.mxu0 0.0
    %965 = vmatpush1.msra.mxu0 0.0
    %966 = vmatprep.subr.mxu0 0.0
    %967 = vmatpush1.msra.mxu0 0.0
    %968 = vmatprep.subr.mxu0 0.0
    %969 = vmatpush1.msra.mxu0 0.0
    %970 = vmatprep.subr.mxu0 0.0
    %971 = vmatpush1.msra.mxu0 0.0
    %972 = vmatprep.subr.mxu0 0.0
    %973 = vmatpush1.msra.mxu0 0.0
    %974 = vmatprep.subr.mxu0 0.0
    %975 = vmatpush1.msra.mxu0 0.0
    %976 = vmatprep.subr.mxu0 0.0
    %977 = vmatpush1.msra.mxu0 0.0
    %978 = vmatprep.mubr.f32.mxu0 0.0
    %v979 = vand.u32 %v620, 4294901760
    %v980 = vsub.f32 %v620, %v979
    %981 = vmatmul.mubr.f32.gmra.mrb[0].mxu0 %v980
    %v982 = vpop.f32.mrb[0].mxu0
    %v983 = vadd.f32 %v879, %v982
    %v984 = vpop.f32.mrb[0].mxu0
    %985 = vdwg.mxu0
    %986 = vmatprep.subr.mxu0 0.0
    %v987 = vand.u32 %v624, 4294901760
    %988 = vmatpush1.msra.mxu0 %v987
    %989 = vmatprep.subr.mxu0 0.0
    %v990 = vand.u32 %v625, 4294901760
    %991 = vmatpush1.msra.mxu0 %v990
    %992 = vmatprep.subr.mxu0 0.0
    %v993 = vand.u32 %v626, 4294901760
    %994 = vmatpush1.msra.mxu0 %v993
    %995 = vmatprep.subr.mxu0 0.0
    %v996 = vand.u32 %v627, 4294901760
    %997 = vmatpush1.msra.mxu0 %v996
    %998 = vmatprep.subr.mxu0 0.0
    %v999 = vand.u32 %v628, 4294901760
    %1000 = vmatpush1.msra.mxu0 %v999
    %1001 = vmatprep.subr.mxu0 0.0
    %v1002 = vand.u32 %v629, 4294901760
    %1003 = vmatpush1.msra.mxu0 %v1002
    %1004 = vmatprep.subr.mxu0 0.0
    %v1005 = vand.u32 %v630, 4294901760
    %1006 = vmatpush1.msra.mxu0 %v1005
    %1007 = vmatprep.subr.mxu0 0.0
    %v1008 = vand.u32 %v631, 4294901760
    %1009 = vmatpush1.msra.mxu0 %v1008
    %1010 = vmatprep.subr.mxu0 0.0
    %v1011 = vand.u32 %v632, 4294901760
    %1012 = vmatpush1.msra.mxu0 %v1011
    %1013 = vmatprep.subr.mxu0 0.0
    %v1014 = vand.u32 %v633, 4294901760
    %1015 = vmatpush1.msra.mxu0 %v1014
    %1016 = vmatprep.subr.mxu0 0.0
    %v1017 = vand.u32 %v634, 4294901760
    %1018 = vmatpush1.msra.mxu0 %v1017
    %1019 = vmatprep.subr.mxu0 0.0
    %v1020 = vand.u32 %v635, 4294901760
    %1021 = vmatpush1.msra.mxu0 %v1020
    %1022 = vmatprep.subr.mxu0 0.0
    %v1023 = vand.u32 %v636, 4294901760
    %1024 = vmatpush1.msra.mxu0 %v1023
    %1025 = vmatprep.subr.mxu0 0.0
    %v1026 = vand.u32 %v637, 4294901760
    %1027 = vmatpush1.msra.mxu0 %v1026
    %1028 = vmatprep.subr.mxu0 0.0
    %v1029 = vand.u32 %v638, 4294901760
    %1030 = vmatpush1.msra.mxu0 %v1029
    %1031 = vmatprep.subr.mxu0 0.0
    %v1032 = vand.u32 %v639, 4294901760
    %1033 = vmatpush1.msra.mxu0 %v1032
    %1034 = vmatprep.subr.mxu0 0.0
    %1035 = vmatpush1.msra.mxu0 0.0
    %1036 = vmatprep.subr.mxu0 0.0
    %1037 = vmatpush1.msra.mxu0 0.0
    %1038 = vmatprep.subr.mxu0 0.0
    %1039 = vmatpush1.msra.mxu0 0.0
    %1040 = vmatprep.subr.mxu0 0.0
    %1041 = vmatpush1.msra.mxu0 0.0
    %1042 = vmatprep.subr.mxu0 0.0
    %1043 = vmatpush1.msra.mxu0 0.0
    %1044 = vmatprep.subr.mxu0 0.0
    %1045 = vmatpush1.msra.mxu0 0.0
    %1046 = vmatprep.subr.mxu0 0.0
    %1047 = vmatpush1.msra.mxu0 0.0
    %1048 = vmatprep.subr.mxu0 0.0
    %1049 = vmatpush1.msra.mxu0 0.0
    %1050 = vmatprep.subr.mxu0 0.0
    %1051 = vmatpush1.msra.mxu0 0.0
    %1052 = vmatprep.subr.mxu0 0.0
    %1053 = vmatpush1.msra.mxu0 0.0
    %1054 = vmatprep.subr.mxu0 0.0
    %1055 = vmatpush1.msra.mxu0 0.0
    %1056 = vmatprep.subr.mxu0 0.0
    %1057 = vmatpush1.msra.mxu0 0.0
    %1058 = vmatprep.subr.mxu0 0.0
    %1059 = vmatpush1.msra.mxu0 0.0
    %1060 = vmatprep.subr.mxu0 0.0
    %1061 = vmatpush1.msra.mxu0 0.0
    %1062 = vmatprep.subr.mxu0 0.0
    %1063 = vmatpush1.msra.mxu0 0.0
    %1064 = vmatprep.subr.mxu0 0.0
    %1065 = vmatpush1.msra.mxu0 0.0
    %1066 = vmatprep.mubr.f32.mxu0 0.0
    %v1067 = vand.u32 %v620, 4294901760
    %v1068 = vsub.f32 %v620, %v1067
    %v1069 = vand.u32 %v1068, 4294901760
    %1070 = vmatmul.mubr.f32.gmra.mrb[0].mxu0 %v1069
    %v1071 = vpop.f32.mrb[0].mxu0
    %v1072 = vadd.f32 %v983, %v1071
    %v1073 = vpop.f32.mrb[0].mxu0
    %1074 = vdwg.mxu0
    %1075 = vmatprep.subr.mxu0 0.0
    %v1076 = vand.u32 %v624, 4294901760
    %v1077 = vsub.f32 %v624, %v1076
    %v1078 = vand.u32 %v1077, 4294901760
    %1079 = vmatpush1.msra.mxu0 %v1078
    %1080 = vmatprep.subr.mxu0 0.0
    %v1081 = vand.u32 %v625, 4294901760
    %v1082 = vsub.f32 %v625, %v1081
    %v1083 = vand.u32 %v1082, 4294901760
    %1084 = vmatpush1.msra.mxu0 %v1083
    %1085 = vmatprep.subr.mxu0 0.0
    %v1086 = vand.u32 %v626, 4294901760
    %v1087 = vsub.f32 %v626, %v1086
    %v1088 = vand.u32 %v1087, 4294901760
    %1089 = vmatpush1.msra.mxu0 %v1088
    %1090 = vmatprep.subr.mxu0 0.0
    %v1091 = vand.u32 %v627, 4294901760
    %v1092 = vsub.f32 %v627, %v1091
    %v1093 = vand.u32 %v1092, 4294901760
    %1094 = vmatpush1.msra.mxu0 %v1093
    %1095 = vmatprep.subr.mxu0 0.0
    %v1096 = vand.u32 %v628, 4294901760
    %v1097 = vsub.f32 %v628, %v1096
    %v1098 = vand.u32 %v1097, 4294901760
    %1099 = vmatpush1.msra.mxu0 %v1098
    %1100 = vmatprep.subr.mxu0 0.0
    %v1101 = vand.u32 %v629, 4294901760
    %v1102 = vsub.f32 %v629, %v1101
    %v1103 = vand.u32 %v1102, 4294901760
    %1104 = vmatpush1.msra.mxu0 %v1103
    %1105 = vmatprep.subr.mxu0 0.0
    %v1106 = vand.u32 %v630, 4294901760
    %v1107 = vsub.f32 %v630, %v1106
    %v1108 = vand.u32 %v1107, 4294901760
    %1109 = vmatpush1.msra.mxu0 %v1108
    %1110 = vmatprep.subr.mxu0 0.0
    %v1111 = vand.u32 %v631, 4294901760
    %v1112 = vsub.f32 %v631, %v1111
    %v1113 = vand.u32 %v1112, 4294901760
    %1114 = vmatpush1.msra.mxu0 %v1113
    %1115 = vmatprep.subr.mxu0 0.0
    %v1116 = vand.u32 %v632, 4294901760
    %v1117 = vsub.f32 %v632, %v1116
    %v1118 = vand.u32 %v1117, 4294901760
    %1119 = vmatpush1.msra.mxu0 %v1118
    %1120 = vmatprep.subr.mxu0 0.0
    %v1121 = vand.u32 %v633, 4294901760
    %v1122 = vsub.f32 %v633, %v1121
    %v1123 = vand.u32 %v1122, 4294901760
    %1124 = vmatpush1.msra.mxu0 %v1123
    %1125 = vmatprep.subr.mxu0 0.0
    %v1126 = vand.u32 %v634, 4294901760
    %v1127 = vsub.f32 %v634, %v1126
    %v1128 = vand.u32 %v1127, 4294901760
    %1129 = vmatpush1.msra.mxu0 %v1128
    %1130 = vmatprep.subr.mxu0 0.0
    %v1131 = vand.u32 %v635, 4294901760
    %v1132 = vsub.f32 %v635, %v1131
    %v1133 = vand.u32 %v1132, 4294901760
    %1134 = vmatpush1.msra.mxu0 %v1133
    %1135 = vmatprep.subr.mxu0 0.0
    %v1136 = vand.u32 %v636, 4294901760
    %v1137 = vsub.f32 %v636, %v1136
    %v1138 = vand.u32 %v1137, 4294901760
    %1139 = vmatpush1.msra.mxu0 %v1138
    %1140 = vmatprep.subr.mxu0 0.0
    %v1141 = vand.u32 %v637, 4294901760
    %v1142 = vsub.f32 %v637, %v1141
    %v1143 = vand.u32 %v1142, 4294901760
    %1144 = vmatpush1.msra.mxu0 %v1143
    %1145 = vmatprep.subr.mxu0 0.0
    %v1146 = vand.u32 %v638, 4294901760
    %v1147 = vsub.f32 %v638, %v1146
    %v1148 = vand.u32 %v1147, 4294901760
    %1149 = vmatpush1.msra.mxu0 %v1148
    %1150 = vmatprep.subr.mxu0 0.0
    %v1151 = vand.u32 %v639, 4294901760
    %v1152 = vsub.f32 %v639, %v1151
    %v1153 = vand.u32 %v1152, 4294901760
    %1154 = vmatpush1.msra.mxu0 %v1153
    %1155 = vmatprep.subr.mxu0 0.0
    %1156 = vmatpush1.msra.mxu0 0.0
    %1157 = vmatprep.subr.mxu0 0.0
    %1158 = vmatpush1.msra.mxu0 0.0
    %1159 = vmatprep.subr.mxu0 0.0
    %1160 = vmatpush1.msra.mxu0 0.0
    %1161 = vmatprep.subr.mxu0 0.0
    %1162 = vmatpush1.msra.mxu0 0.0
    %1163 = vmatprep.subr.mxu0 0.0
    %1164 = vmatpush1.msra.mxu0 0.0
    %1165 = vmatprep.subr.mxu0 0.0
    %1166 = vmatpush1.msra.mxu0 0.0
    %1167 = vmatprep.subr.mxu0 0.0
    %1168 = vmatpush1.msra.mxu0 0.0
    %1169 = vmatprep.subr.mxu0 0.0
    %1170 = vmatpush1.msra.mxu0 0.0
    %1171 = vmatprep.subr.mxu0 0.0
    %1172 = vmatpush1.msra.mxu0 0.0
    %1173 = vmatprep.subr.mxu0 0.0
    %1174 = vmatpush1.msra.mxu0 0.0
    %1175 = vmatprep.subr.mxu0 0.0
    %1176 = vmatpush1.msra.mxu0 0.0
    %1177 = vmatprep.subr.mxu0 0.0
    %1178 = vmatpush1.msra.mxu0 0.0
    %1179 = vmatprep.subr.mxu0 0.0
    %1180 = vmatpush1.msra.mxu0 0.0
    %1181 = vmatprep.subr.mxu0 0.0
    %1182 = vmatpush1.msra.mxu0 0.0
    %1183 = vmatprep.subr.mxu0 0.0
    %1184 = vmatpush1.msra.mxu0 0.0
    %1185 = vmatprep.subr.mxu0 0.0
    %1186 = vmatpush1.msra.mxu0 0.0
    %1187 = vmatprep.mubr.f32.mxu0 0.0
    %v1188 = vand.u32 %v620, 4294901760
    %1189 = vmatmul.mubr.f32.gmra.mrb[0].mxu0 %v1188
    %v1190 = vpop.f32.mrb[0].mxu0
    %v1191 = vadd.f32 %v1072, %v1190
    %v1192 = vpop.f32.mrb[0].mxu0
    %1193 = vdwg.mxu0
    %1194 = vmatprep.subr.mxu0 0.0
    %v1195 = vand.u32 %v624, 4294901760
    %1196 = vmatpush1.msra.mxu0 %v1195
    %1197 = vmatprep.subr.mxu0 0.0
    %v1198 = vand.u32 %v625, 4294901760
    %1199 = vmatpush1.msra.mxu0 %v1198
    %1200 = vmatprep.subr.mxu0 0.0
    %v1201 = vand.u32 %v626, 4294901760
    %1202 = vmatpush1.msra.mxu0 %v1201
    %1203 = vmatprep.subr.mxu0 0.0
    %v1204 = vand.u32 %v627, 4294901760
    %1205 = vmatpush1.msra.mxu0 %v1204
    %1206 = vmatprep.subr.mxu0 0.0
    %v1207 = vand.u32 %v628, 4294901760
    %1208 = vmatpush1.msra.mxu0 %v1207
    %1209 = vmatprep.subr.mxu0 0.0
    %v1210 = vand.u32 %v629, 4294901760
    %1211 = vmatpush1.msra.mxu0 %v1210
    %1212 = vmatprep.subr.mxu0 0.0
    %v1213 = vand.u32 %v630, 4294901760
    %1214 = vmatpush1.msra.mxu0 %v1213
    %1215 = vmatprep.subr.mxu0 0.0
    %v1216 = vand.u32 %v631, 4294901760
    %1217 = vmatpush1.msra.mxu0 %v1216
    %1218 = vmatprep.subr.mxu0 0.0
    %v1219 = vand.u32 %v632, 4294901760
    %1220 = vmatpush1.msra.mxu0 %v1219
    %1221 = vmatprep.subr.mxu0 0.0
    %v1222 = vand.u32 %v633, 4294901760
    %1223 = vmatpush1.msra.mxu0 %v1222
    %1224 = vmatprep.subr.mxu0 0.0
    %v1225 = vand.u32 %v634, 4294901760
    %1226 = vmatpush1.msra.mxu0 %v1225
    %1227 = vmatprep.subr.mxu0 0.0
    %v1228 = vand.u32 %v635, 4294901760
    %1229 = vmatpush1.msra.mxu0 %v1228
    %1230 = vmatprep.subr.mxu0 0.0
    %v1231 = vand.u32 %v636, 4294901760
    %1232 = vmatpush1.msra.mxu0 %v1231
    %1233 = vmatprep.subr.mxu0 0.0
    %v1234 = vand.u32 %v637, 4294901760
    %1235 = vmatpush1.msra.mxu0 %v1234
    %1236 = vmatprep.subr.mxu0 0.0
    %v1237 = vand.u32 %v638, 4294901760
    %1238 = vmatpush1.msra.mxu0 %v1237
    %1239 = vmatprep.subr.mxu0 0.0
    %v1240 = vand.u32 %v639, 4294901760
    %1241 = vmatpush1.msra.mxu0 %v1240
    %1242 = vmatprep.subr.mxu0 0.0
    %1243 = vmatpush1.msra.mxu0 0.0
    %1244 = vmatprep.subr.mxu0 0.0
    %1245 = vmatpush1.msra.mxu0 0.0
    %1246 = vmatprep.subr.mxu0 0.0
    %1247 = vmatpush1.msra.mxu0 0.0
    %1248 = vmatprep.subr.mxu0 0.0
    %1249 = vmatpush1.msra.mxu0 0.0
    %1250 = vmatprep.subr.mxu0 0.0
    %1251 = vmatpush1.msra.mxu0 0.0
    %1252 = vmatprep.subr.mxu0 0.0
    %1253 = vmatpush1.msra.mxu0 0.0
    %1254 = vmatprep.subr.mxu0 0.0
    %1255 = vmatpush1.msra.mxu0 0.0
    %1256 = vmatprep.subr.mxu0 0.0
    %1257 = vmatpush1.msra.mxu0 0.0
    %1258 = vmatprep.subr.mxu0 0.0
    %1259 = vmatpush1.msra.mxu0 0.0
    %1260 = vmatprep.subr.mxu0 0.0
    %1261 = vmatpush1.msra.mxu0 0.0
    %1262 = vmatprep.subr.mxu0 0.0
    %1263 = vmatpush1.msra.mxu0 0.0
    %1264 = vmatprep.subr.mxu0 0.0
    %1265 = vmatpush1.msra.mxu0 0.0
    %1266 = vmatprep.subr.mxu0 0.0
    %1267 = vmatpush1.msra.mxu0 0.0
    %1268 = vmatprep.subr.mxu0 0.0
    %1269 = vmatpush1.msra.mxu0 0.0
    %1270 = vmatprep.subr.mxu0 0.0
    %1271 = vmatpush1.msra.mxu0 0.0
    %1272 = vmatprep.subr.mxu0 0.0
    %1273 = vmatpush1.msra.mxu0 0.0
    %1274 = vmatprep.mubr.f32.mxu0 0.0
    %v1275 = vand.u32 %v620, 4294901760
    %1276 = vmatmul.mubr.f32.gmra.mrb[0].mxu0 %v1275
    %v1277 = vpop.f32.mrb[0].mxu0
    %v1278 = vadd.f32 %v1191, %v1277
    %v1279 = vpop.f32.mrb[0].mxu0
    %1280 = vdwg.mxu0
    %v1281 = vmul.f32 %v1278, 0.03125
    %v1282 = vsub.f32 %v620, %v1281
    %v1283 = vmul.f32 %v1282, %v1282
    %1284 = vmatprep.subr.mxu0 0.0
    %v1285 = vand.u32 %v624, 4294901760
    %1286 = vmatpush1.msra.mxu0 %v1285
    %1287 = vmatprep.subr.mxu0 0.0
    %v1288 = vand.u32 %v625, 4294901760
    %1289 = vmatpush1.msra.mxu0 %v1288
    %1290 = vmatprep.subr.mxu0 0.0
    %v1291 = vand.u32 %v626, 4294901760
    %1292 = vmatpush1.msra.mxu0 %v1291
    %1293 = vmatprep.subr.mxu0 0.0
    %v1294 = vand.u32 %v627, 4294901760
    %1295 = vmatpush1.msra.mxu0 %v1294
    %1296 = vmatprep.subr.mxu0 0.0
    %v1297 = vand.u32 %v628, 4294901760
    %1298 = vmatpush1.msra.mxu0 %v1297
    %1299 = vmatprep.subr.mxu0 0.0
    %v1300 = vand.u32 %v629, 4294901760
    %1301 = vmatpush1.msra.mxu0 %v1300
    %1302 = vmatprep.subr.mxu0 0.0
    %v1303 = vand.u32 %v630, 4294901760
    %1304 = vmatpush1.msra.mxu0 %v1303
    %1305 = vmatprep.subr.mxu0 0.0
    %v1306 = vand.u32 %v631, 4294901760
    %1307 = vmatpush1.msra.mxu0 %v1306
    %1308 = vmatprep.subr.mxu0 0.0
    %v1309 = vand.u32 %v632, 4294901760
    %1310 = vmatpush1.msra.mxu0 %v1309
    %1311 = vmatprep.subr.mxu0 0.0
    %v1312 = vand.u32 %v633, 4294901760
    %1313 = vmatpush1.msra.mxu0 %v1312
    %1314 = vmatprep.subr.mxu0 0.0
    %v1315 = vand.u32 %v634, 4294901760
    %1316 = vmatpush1.msra.mxu0 %v1315
    %1317 = vmatprep.subr.mxu0 0.0
    %v1318 = vand.u32 %v635, 4294901760
    %1319 = vmatpush1.msra.mxu0 %v1318
    %1320 = vmatprep.subr.mxu0 0.0
    %v1321 = vand.u32 %v636, 4294901760
    %1322 = vmatpush1.msra.mxu0 %v1321
    %1323 = vmatprep.subr.mxu0 0.0
    %v1324 = vand.u32 %v637, 4294901760
    %1325 = vmatpush1.msra.mxu0 %v1324
    %1326 = vmatprep.subr.mxu0 0.0
    %v1327 = vand.u32 %v638, 4294901760
    %1328 = vmatpush1.msra.mxu0 %v1327
    %1329 = vmatprep.subr.mxu0 0.0
    %v1330 = vand.u32 %v639, 4294901760
    %1331 = vmatpush1.msra.mxu0 %v1330
    %1332 = vmatprep.subr.mxu0 0.0
    %1333 = vmatpush1.msra.mxu0 0.0
    %1334 = vmatprep.subr.mxu0 0.0
    %1335 = vmatpush1.msra.mxu0 0.0
    %1336 = vmatprep.subr.mxu0 0.0
    %1337 = vmatpush1.msra.mxu0 0.0
    %1338 = vmatprep.subr.mxu0 0.0
    %1339 = vmatpush1.msra.mxu0 0.0
    %1340 = vmatprep.subr.mxu0 0.0
    %1341 = vmatpush1.msra.mxu0 0.0
    %1342 = vmatprep.subr.mxu0 0.0
    %1343 = vmatpush1.msra.mxu0 0.0
    %1344 = vmatprep.subr.mxu0 0.0
    %1345 = vmatpush1.msra.mxu0 0.0
    %1346 = vmatprep.subr.mxu0 0.0
    %1347 = vmatpush1.msra.mxu0 0.0
    %1348 = vmatprep.subr.mxu0 0.0
    %1349 = vmatpush1.msra.mxu0 0.0
    %1350 = vmatprep.subr.mxu0 0.0
    %1351 = vmatpush1.msra.mxu0 0.0
    %1352 = vmatprep.subr.mxu0 0.0
    %1353 = vmatpush1.msra.mxu0 0.0
    %1354 = vmatprep.subr.mxu0 0.0
    %1355 = vmatpush1.msra.mxu0 0.0
    %1356 = vmatprep.subr.mxu0 0.0
    %1357 = vmatpush1.msra.mxu0 0.0
    %1358 = vmatprep.subr.mxu0 0.0
    %1359 = vmatpush1.msra.mxu0 0.0
    %1360 = vmatprep.subr.mxu0 0.0
    %1361 = vmatpush1.msra.mxu0 0.0
    %1362 = vmatprep.subr.mxu0 0.0
    %1363 = vmatpush1.msra.mxu0 0.0
    %1364 = vmatprep.mubr.f32.mxu0 0.0
    %v1365 = vand.u32 %v1283, 4294901760
    %v1366 = vsub.f32 %v1283, %v1365
    %v1367 = vand.u32 %v1366, 4294901760
    %v1368 = vsub.f32 %v1366, %v1367
    %v1369 = vand.u32 %v1368, 4294901760
    %1370 = vmatmul.mubr.f32.gmra.mrb[0].mxu0 %v1369
    %v1371 = vpop.f32.mrb[0].mxu0
    %v1372 = vadd.f32 0.0, %v1371
    %v1373 = vpop.f32.mrb[0].mxu0
    %1374 = vdwg.mxu0
    %1375 = vmatprep.subr.mxu0 0.0
    %v1376 = vand.u32 %v624, 4294901760
    %v1377 = vsub.f32 %v624, %v1376
    %v1378 = vand.u32 %v1377, 4294901760
    %v1379 = vsub.f32 %v1377, %v1378
    %v1380 = vand.u32 %v1379, 4294901760
    %1381 = vmatpush1.msra.mxu0 %v1380
    %1382 = vmatprep.subr.mxu0 0.0
    %v1383 = vand.u32 %v625, 4294901760
    %v1384 = vsub.f32 %v625, %v1383
    %v1385 = vand.u32 %v1384, 4294901760
    %v1386 = vsub.f32 %v1384, %v1385
    %v1387 = vand.u32 %v1386, 4294901760
    %1388 = vmatpush1.msra.mxu0 %v1387
    %1389 = vmatprep.subr.mxu0 0.0
    %v1390 = vand.u32 %v626, 4294901760
    %v1391 = vsub.f32 %v626, %v1390
    %v1392 = vand.u32 %v1391, 4294901760
    %v1393 = vsub.f32 %v1391, %v1392
    %v1394 = vand.u32 %v1393, 4294901760
    %1395 = vmatpush1.msra.mxu0 %v1394
    %1396 = vmatprep.subr.mxu0 0.0
    %v1397 = vand.u32 %v627, 4294901760
    %v1398 = vsub.f32 %v627, %v1397
    %v1399 = vand.u32 %v1398, 4294901760
    %v1400 = vsub.f32 %v1398, %v1399
    %v1401 = vand.u32 %v1400, 4294901760
    %1402 = vmatpush1.msra.mxu0 %v1401
    %1403 = vmatprep.subr.mxu0 0.0
    %v1404 = vand.u32 %v628, 4294901760
    %v1405 = vsub.f32 %v628, %v1404
    %v1406 = vand.u32 %v1405, 4294901760
    %v1407 = vsub.f32 %v1405, %v1406
    %v1408 = vand.u32 %v1407, 4294901760
    %1409 = vmatpush1.msra.mxu0 %v1408
    %1410 = vmatprep.subr.mxu0 0.0
    %v1411 = vand.u32 %v629, 4294901760
    %v1412 = vsub.f32 %v629, %v1411
    %v1413 = vand.u32 %v1412, 4294901760
    %v1414 = vsub.f32 %v1412, %v1413
    %v1415 = vand.u32 %v1414, 4294901760
    %1416 = vmatpush1.msra.mxu0 %v1415
    %1417 = vmatprep.subr.mxu0 0.0
    %v1418 = vand.u32 %v630, 4294901760
    %v1419 = vsub.f32 %v630, %v1418
    %v1420 = vand.u32 %v1419, 4294901760
    %v1421 = vsub.f32 %v1419, %v1420
    %v1422 = vand.u32 %v1421, 4294901760
    %1423 = vmatpush1.msra.mxu0 %v1422
    %1424 = vmatprep.subr.mxu0 0.0
    %v1425 = vand.u32 %v631, 4294901760
    %v1426 = vsub.f32 %v631, %v1425
    %v1427 = vand.u32 %v1426, 4294901760
    %v1428 = vsub.f32 %v1426, %v1427
    %v1429 = vand.u32 %v1428, 4294901760
    %1430 = vmatpush1.msra.mxu0 %v1429
    %1431 = vmatprep.subr.mxu0 0.0
    %v1432 = vand.u32 %v632, 4294901760
    %v1433 = vsub.f32 %v632, %v1432
    %v1434 = vand.u32 %v1433, 4294901760
    %v1435 = vsub.f32 %v1433, %v1434
    %v1436 = vand.u32 %v1435, 4294901760
    %1437 = vmatpush1.msra.mxu0 %v1436
    %1438 = vmatprep.subr.mxu0 0.0
    %v1439 = vand.u32 %v633, 4294901760
    %v1440 = vsub.f32 %v633, %v1439
    %v1441 = vand.u32 %v1440, 4294901760
    %v1442 = vsub.f32 %v1440, %v1441
    %v1443 = vand.u32 %v1442, 4294901760
    %1444 = vmatpush1.msra.mxu0 %v1443
    %1445 = vmatprep.subr.mxu0 0.0
    %v1446 = vand.u32 %v634, 4294901760
    %v1447 = vsub.f32 %v634, %v1446
    %v1448 = vand.u32 %v1447, 4294901760
    %v1449 = vsub.f32 %v1447, %v1448
    %v1450 = vand.u32 %v1449, 4294901760
    %1451 = vmatpush1.msra.mxu0 %v1450
    %1452 = vmatprep.subr.mxu0 0.0
    %v1453 = vand.u32 %v635, 4294901760
    %v1454 = vsub.f32 %v635, %v1453
    %v1455 = vand.u32 %v1454, 4294901760
    %v1456 = vsub.f32 %v1454, %v1455
    %v1457 = vand.u32 %v1456, 4294901760
    %1458 = vmatpush1.msra.mxu0 %v1457
    %1459 = vmatprep.subr.mxu0 0.0
    %v1460 = vand.u32 %v636, 4294901760
    %v1461 = vsub.f32 %v636, %v1460
    %v1462 = vand.u32 %v1461, 4294901760
    %v1463 = vsub.f32 %v1461, %v1462
    %v1464 = vand.u32 %v1463, 4294901760
    %1465 = vmatpush1.msra.mxu0 %v1464
    %1466 = vmatprep.subr.mxu0 0.0
    %v1467 = vand.u32 %v637, 4294901760
    %v1468 = vsub.f32 %v637, %v1467
    %v1469 = vand.u32 %v1468, 4294901760
    %v1470 = vsub.f32 %v1468, %v1469
    %v1471 = vand.u32 %v1470, 4294901760
    %1472 = vmatpush1.msra.mxu0 %v1471
    %1473 = vmatprep.subr.mxu0 0.0
    %v1474 = vand.u32 %v638, 4294901760
    %v1475 = vsub.f32 %v638, %v1474
    %v1476 = vand.u32 %v1475, 4294901760
    %v1477 = vsub.f32 %v1475, %v1476
    %v1478 = vand.u32 %v1477, 4294901760
    %1479 = vmatpush1.msra.mxu0 %v1478
    %1480 = vmatprep.subr.mxu0 0.0
    %v1481 = vand.u32 %v639, 4294901760
    %v1482 = vsub.f32 %v639, %v1481
    %v1483 = vand.u32 %v1482, 4294901760
    %v1484 = vsub.f32 %v1482, %v1483
    %v1485 = vand.u32 %v1484, 4294901760
    %1486 = vmatpush1.msra.mxu0 %v1485
    %1487 = vmatprep.subr.mxu0 0.0
    %1488 = vmatpush1.msra.mxu0 0.0
    %1489 = vmatprep.subr.mxu0 0.0
    %1490 = vmatpush1.msra.mxu0 0.0
    %1491 = vmatprep.subr.mxu0 0.0
    %1492 = vmatpush1.msra.mxu0 0.0
    %1493 = vmatprep.subr.mxu0 0.0
    %1494 = vmatpush1.msra.mxu0 0.0
    %1495 = vmatprep.subr.mxu0 0.0
    %1496 = vmatpush1.msra.mxu0 0.0
    %1497 = vmatprep.subr.mxu0 0.0
    %1498 = vmatpush1.msra.mxu0 0.0
    %1499 = vmatprep.subr.mxu0 0.0
    %1500 = vmatpush1.msra.mxu0 0.0
    %1501 = vmatprep.subr.mxu0 0.0
    %1502 = vmatpush1.msra.mxu0 0.0
    %1503 = vmatprep.subr.mxu0 0.0
    %1504 = vmatpush1.msra.mxu0 0.0
    %1505 = vmatprep.subr.mxu0 0.0
    %1506 = vmatpush1.msra.mxu0 0.0
    %1507 = vmatprep.subr.mxu0 0.0
    %1508 = vmatpush1.msra.mxu0 0.0
    %1509 = vmatprep.subr.mxu0 0.0
    %1510 = vmatpush1.msra.mxu0 0.0
    %1511 = vmatprep.subr.mxu0 0.0
    %1512 = vmatpush1.msra.mxu0 0.0
    %1513 = vmatprep.subr.mxu0 0.0
    %1514 = vmatpush1.msra.mxu0 0.0
    %1515 = vmatprep.subr.mxu0 0.0
    %1516 = vmatpush1.msra.mxu0 0.0
    %1517 = vmatprep.subr.mxu0 0.0
    %1518 = vmatpush1.msra.mxu0 0.0
    %1519 = vmatprep.mubr.f32.mxu0 0.0
    %v1520 = vand.u32 %v1283, 4294901760
    %1521 = vmatmul.mubr.f32.gmra.mrb[0].mxu0 %v1520
    %v1522 = vpop.f32.mrb[0].mxu0
    %v1523 = vadd.f32 %v1372, %v1522
    %v1524 = vpop.f32.mrb[0].mxu0
    %1525 = vdwg.mxu0
    %1526 = vmatprep.subr.mxu0 0.0
    %v1527 = vand.u32 %v624, 4294901760
    %v1528 = vsub.f32 %v624, %v1527
    %1529 = vmatpush1.msra.mxu0 %v1528
    %1530 = vmatprep.subr.mxu0 0.0
    %v1531 = vand.u32 %v625, 4294901760
    %v1532 = vsub.f32 %v625, %v1531
    %1533 = vmatpush1.msra.mxu0 %v1532
    %1534 = vmatprep.subr.mxu0 0.0
    %v1535 = vand.u32 %v626, 4294901760
    %v1536 = vsub.f32 %v626, %v1535
    %1537 = vmatpush1.msra.mxu0 %v1536
    %1538 = vmatprep.subr.mxu0 0.0
    %v1539 = vand.u32 %v627, 4294901760
    %v1540 = vsub.f32 %v627, %v1539
    %1541 = vmatpush1.msra.mxu0 %v1540
    %1542 = vmatprep.subr.mxu0 0.0
    %v1543 = vand.u32 %v628, 4294901760
    %v1544 = vsub.f32 %v628, %v1543
    %1545 = vmatpush1.msra.mxu0 %v1544
    %1546 = vmatprep.subr.mxu0 0.0
    %v1547 = vand.u32 %v629, 4294901760
    %v1548 = vsub.f32 %v629, %v1547
    %1549 = vmatpush1.msra.mxu0 %v1548
    %1550 = vmatprep.subr.mxu0 0.0
    %v1551 = vand.u32 %v630, 4294901760
    %v1552 = vsub.f32 %v630, %v1551
    %1553 = vmatpush1.msra.mxu0 %v1552
    %1554 = vmatprep.subr.mxu0 0.0
    %v1555 = vand.u32 %v631, 4294901760
    %v1556 = vsub.f32 %v631, %v1555
    %1557 = vmatpush1.msra.mxu0 %v1556
    %1558 = vmatprep.subr.mxu0 0.0
    %v1559 = vand.u32 %v632, 4294901760
    %v1560 = vsub.f32 %v632, %v1559
    %1561 = vmatpush1.msra.mxu0 %v1560
    %1562 = vmatprep.subr.mxu0 0.0
    %v1563 = vand.u32 %v633, 4294901760
    %v1564 = vsub.f32 %v633, %v1563
    %1565 = vmatpush1.msra.mxu0 %v1564
    %1566 = vmatprep.subr.mxu0 0.0
    %v1567 = vand.u32 %v634, 4294901760
    %v1568 = vsub.f32 %v634, %v1567
    %1569 = vmatpush1.msra.mxu0 %v1568
    %1570 = vmatprep.subr.mxu0 0.0
    %v1571 = vand.u32 %v635, 4294901760
    %v1572 = vsub.f32 %v635, %v1571
    %1573 = vmatpush1.msra.mxu0 %v1572
    %1574 = vmatprep.subr.mxu0 0.0
    %v1575 = vand.u32 %v636, 4294901760
    %v1576 = vsub.f32 %v636, %v1575
    %1577 = vmatpush1.msra.mxu0 %v1576
    %1578 = vmatprep.subr.mxu0 0.0
    %v1579 = vand.u32 %v637, 4294901760
    %v1580 = vsub.f32 %v637, %v1579
    %1581 = vmatpush1.msra.mxu0 %v1580
    %1582 = vmatprep.subr.mxu0 0.0
    %v1583 = vand.u32 %v638, 4294901760
    %v1584 = vsub.f32 %v638, %v1583
    %1585 = vmatpush1.msra.mxu0 %v1584
    %1586 = vmatprep.subr.mxu0 0.0
    %v1587 = vand.u32 %v639, 4294901760
    %v1588 = vsub.f32 %v639, %v1587
    %1589 = vmatpush1.msra.mxu0 %v1588
    %1590 = vmatprep.subr.mxu0 0.0
    %1591 = vmatpush1.msra.mxu0 0.0
    %1592 = vmatprep.subr.mxu0 0.0
    %1593 = vmatpush1.msra.mxu0 0.0
    %1594 = vmatprep.subr.mxu0 0.0
    %1595 = vmatpush1.msra.mxu0 0.0
    %1596 = vmatprep.subr.mxu0 0.0
    %1597 = vmatpush1.msra.mxu0 0.0
    %1598 = vmatprep.subr.mxu0 0.0
    %1599 = vmatpush1.msra.mxu0 0.0
    %1600 = vmatprep.subr.mxu0 0.0
    %1601 = vmatpush1.msra.mxu0 0.0
    %1602 = vmatprep.subr.mxu0 0.0
    %1603 = vmatpush1.msra.mxu0 0.0
    %1604 = vmatprep.subr.mxu0 0.0
    %1605 = vmatpush1.msra.mxu0 0.0
    %1606 = vmatprep.subr.mxu0 0.0
    %1607 = vmatpush1.msra.mxu0 0.0
    %1608 = vmatprep.subr.mxu0 0.0
    %1609 = vmatpush1.msra.mxu0 0.0
    %1610 = vmatprep.subr.mxu0 0.0
    %1611 = vmatpush1.msra.mxu0 0.0
    %1612 = vmatprep.subr.mxu0 0.0
    %1613 = vmatpush1.msra.mxu0 0.0
    %1614 = vmatprep.subr.mxu0 0.0
    %1615 = vmatpush1.msra.mxu0 0.0
    %1616 = vmatprep.subr.mxu0 0.0
    %1617 = vmatpush1.msra.mxu0 0.0
    %1618 = vmatprep.subr.mxu0 0.0
    %1619 = vmatpush1.msra.mxu0 0.0
    %1620 = vmatprep.subr.mxu0 0.0
    %1621 = vmatpush1.msra.mxu0 0.0
    %1622 = vmatprep.mubr.f32.mxu0 0.0
    %v1623 = vand.u32 %v1283, 4294901760
    %v1624 = vsub.f32 %v1283, %v1623
    %1625 = vmatmul.mubr.f32.gmra.mrb[0].mxu0 %v1624
    %v1626 = vpop.f32.mrb[0].mxu0
    %v1627 = vadd.f32 %v1523, %v1626
    %v1628 = vpop.f32.mrb[0].mxu0
    %1629 = vdwg.mxu0
    %1630 = vmatprep.subr.mxu0 0.0
    %v1631 = vand.u32 %v624, 4294901760
    %1632 = vmatpush1.msra.mxu0 %v1631
    %1633 = vmatprep.subr.mxu0 0.0
    %v1634 = vand.u32 %v625, 4294901760
    %1635 = vmatpush1.msra.mxu0 %v1634
    %1636 = vmatprep.subr.mxu0 0.0
    %v1637 = vand.u32 %v626, 4294901760
    %1638 = vmatpush1.msra.mxu0 %v1637
    %1639 = vmatprep.subr.mxu0 0.0
    %v1640 = vand.u32 %v627, 4294901760
    %1641 = vmatpush1.msra.mxu0 %v1640
    %1642 = vmatprep.subr.mxu0 0.0
    %v1643 = vand.u32 %v628, 4294901760
    %1644 = vmatpush1.msra.mxu0 %v1643
    %1645 = vmatprep.subr.mxu0 0.0
    %v1646 = vand.u32 %v629, 4294901760
    %1647 = vmatpush1.msra.mxu0 %v1646
    %1648 = vmatprep.subr.mxu0 0.0
    %v1649 = vand.u32 %v630, 4294901760
    %1650 = vmatpush1.msra.mxu0 %v1649
    %1651 = vmatprep.subr.mxu0 0.0
    %v1652 = vand.u32 %v631, 4294901760
    %1653 = vmatpush1.msra.mxu0 %v1652
    %1654 = vmatprep.subr.mxu0 0.0
    %v1655 = vand.u32 %v632, 4294901760
    %1656 = vmatpush1.msra.mxu0 %v1655
    %1657 = vmatprep.subr.mxu0 0.0
    %v1658 = vand.u32 %v633, 4294901760
    %1659 = vmatpush1.msra.mxu0 %v1658
    %1660 = vmatprep.subr.mxu0 0.0
    %v1661 = vand.u32 %v634, 4294901760
    %1662 = vmatpush1.msra.mxu0 %v1661
    %1663 = vmatprep.subr.mxu0 0.0
    %v1664 = vand.u32 %v635, 4294901760
    %1665 = vmatpush1.msra.mxu0 %v1664
    %1666 = vmatprep.subr.mxu0 0.0
    %v1667 = vand.u32 %v636, 4294901760
    %1668 = vmatpush1.msra.mxu0 %v1667
    %1669 = vmatprep.subr.mxu0 0.0
    %v1670 = vand.u32 %v637, 4294901760
    %1671 = vmatpush1.msra.mxu0 %v1670
    %1672 = vmatprep.subr.mxu0 0.0
    %v1673 = vand.u32 %v638, 4294901760
    %1674 = vmatpush1.msra.mxu0 %v1673
    %1675 = vmatprep.subr.mxu0 0.0
    %v1676 = vand.u32 %v639, 4294901760
    %1677 = vmatpush1.msra.mxu0 %v1676
    %1678 = vmatprep.subr.mxu0 0.0
    %1679 = vmatpush1.msra.mxu0 0.0
    %1680 = vmatprep.subr.mxu0 0.0
    %1681 = vmatpush1.msra.mxu0 0.0
    %1682 = vmatprep.subr.mxu0 0.0
    %1683 = vmatpush1.msra.mxu0 0.0
    %1684 = vmatprep.subr.mxu0 0.0
    %1685 = vmatpush1.msra.mxu0 0.0
    %1686 = vmatprep.subr.mxu0 0.0
    %1687 = vmatpush1.msra.mxu0 0.0
    %1688 = vmatprep.subr.mxu0 0.0
    %1689 = vmatpush1.msra.mxu0 0.0
    %1690 = vmatprep.subr.mxu0 0.0
    %1691 = vmatpush1.msra.mxu0 0.0
    %1692 = vmatprep.subr.mxu0 0.0
    %1693 = vmatpush1.msra.mxu0 0.0
    %1694 = vmatprep.subr.mxu0 0.0
    %1695 = vmatpush1.msra.mxu0 0.0
    %1696 = vmatprep.subr.mxu0 0.0
    %1697 = vmatpush1.msra.mxu0 0.0
    %1698 = vmatprep.subr.mxu0 0.0
    %1699 = vmatpush1.msra.mxu0 0.0
    %1700 = vmatprep.subr.mxu0 0.0
    %1701 = vmatpush1.msra.mxu0 0.0
    %1702 = vmatprep.subr.mxu0 0.0
    %1703 = vmatpush1.msra.mxu0 0.0
    %1704 = vmatprep.subr.mxu0 0.0
    %1705 = vmatpush1.msra.mxu0 0.0
    %1706 = vmatprep.subr.mxu0 0.0
    %1707 = vmatpush1.msra.mxu0 0.0
    %1708 = vmatprep.subr.mxu0 0.0
    %1709 = vmatpush1.msra.mxu0 0.0
    %1710 = vmatprep.mubr.f32.mxu0 0.0
    %v1711 = vand.u32 %v1283, 4294901760
    %v1712 = vsub.f32 %v1283, %v1711
    %v1713 = vand.u32 %v1712, 4294901760
    %1714 = vmatmul.mubr.f32.gmra.mrb[0].mxu0 %v1713
    %v1715 = vpop.f32.mrb[0].mxu0
    %v1716 = vadd.f32 %v1627, %v1715
    %v1717 = vpop.f32.mrb[0].mxu0
    %1718 = vdwg.mxu0
    %1719 = vmatprep.subr.mxu0 0.0
    %v1720 = vand.u32 %v624, 4294901760
    %v1721 = vsub.f32 %v624, %v1720
    %v1722 = vand.u32 %v1721, 4294901760
    %1723 = vmatpush1.msra.mxu0 %v1722
    %1724 = vmatprep.subr.mxu0 0.0
    %v1725 = vand.u32 %v625, 4294901760
    %v1726 = vsub.f32 %v625, %v1725
    %v1727 = vand.u32 %v1726, 4294901760
    %1728 = vmatpush1.msra.mxu0 %v1727
    %1729 = vmatprep.subr.mxu0 0.0
    %v1730 = vand.u32 %v626, 4294901760
    %v1731 = vsub.f32 %v626, %v1730
    %v1732 = vand.u32 %v1731, 4294901760
    %1733 = vmatpush1.msra.mxu0 %v1732
    %1734 = vmatprep.subr.mxu0 0.0
    %v1735 = vand.u32 %v627, 4294901760
    %v1736 = vsub.f32 %v627, %v1735
    %v1737 = vand.u32 %v1736, 4294901760
    %1738 = vmatpush1.msra.mxu0 %v1737
    %1739 = vmatprep.subr.mxu0 0.0
    %v1740 = vand.u32 %v628, 4294901760
    %v1741 = vsub.f32 %v628, %v1740
    %v1742 = vand.u32 %v1741, 4294901760
    %1743 = vmatpush1.msra.mxu0 %v1742
    %1744 = vmatprep.subr.mxu0 0.0
    %v1745 = vand.u32 %v629, 4294901760
    %v1746 = vsub.f32 %v629, %v1745
    %v1747 = vand.u32 %v1746, 4294901760
    %1748 = vmatpush1.msra.mxu0 %v1747
    %1749 = vmatprep.subr.mxu0 0.0
    %v1750 = vand.u32 %v630, 4294901760
    %v1751 = vsub.f32 %v630, %v1750
    %v1752 = vand.u32 %v1751, 4294901760
    %1753 = vmatpush1.msra.mxu0 %v1752
    %1754 = vmatprep.subr.mxu0 0.0
    %v1755 = vand.u32 %v631, 4294901760
    %v1756 = vsub.f32 %v631, %v1755
    %v1757 = vand.u32 %v1756, 4294901760
    %1758 = vmatpush1.msra.mxu0 %v1757
    %1759 = vmatprep.subr.mxu0 0.0
    %v1760 = vand.u32 %v632, 4294901760
    %v1761 = vsub.f32 %v632, %v1760
    %v1762 = vand.u32 %v1761, 4294901760
    %1763 = vmatpush1.msra.mxu0 %v1762
    %1764 = vmatprep.subr.mxu0 0.0
    %v1765 = vand.u32 %v633, 4294901760
    %v1766 = vsub.f32 %v633, %v1765
    %v1767 = vand.u32 %v1766, 4294901760
    %1768 = vmatpush1.msra.mxu0 %v1767
    %1769 = vmatprep.subr.mxu0 0.0
    %v1770 = vand.u32 %v634, 4294901760
    %v1771 = vsub.f32 %v634, %v1770
    %v1772 = vand.u32 %v1771, 4294901760
    %1773 = vmatpush1.msra.mxu0 %v1772
    %1774 = vmatprep.subr.mxu0 0.0
    %v1775 = vand.u32 %v635, 4294901760
    %v1776 = vsub.f32 %v635, %v1775
    %v1777 = vand.u32 %v1776, 4294901760
    %1778 = vmatpush1.msra.mxu0 %v1777
    %1779 = vmatprep.subr.mxu0 0.0
    %v1780 = vand.u32 %v636, 4294901760
    %v1781 = vsub.f32 %v636, %v1780
    %v1782 = vand.u32 %v1781, 4294901760
    %1783 = vmatpush1.msra.mxu0 %v1782
    %1784 = vmatprep.subr.mxu0 0.0
    %v1785 = vand.u32 %v637, 4294901760
    %v1786 = vsub.f32 %v637, %v1785
    %v1787 = vand.u32 %v1786, 4294901760
    %1788 = vmatpush1.msra.mxu0 %v1787
    %1789 = vmatprep.subr.mxu0 0.0
    %v1790 = vand.u32 %v638, 4294901760
    %v1791 = vsub.f32 %v638, %v1790
    %v1792 = vand.u32 %v1791, 4294901760
    %1793 = vmatpush1.msra.mxu0 %v1792
    %1794 = vmatprep.subr.mxu0 0.0
    %v1795 = vand.u32 %v639, 4294901760
    %v1796 = vsub.f32 %v639, %v1795
    %v1797 = vand.u32 %v1796, 4294901760
    %1798 = vmatpush1.msra.mxu0 %v1797
    %1799 = vmatprep.subr.mxu0 0.0
    %1800 = vmatpush1.msra.mxu0 0.0
    %1801 = vmatprep.subr.mxu0 0.0
    %1802 = vmatpush1.msra.mxu0 0.0
    %1803 = vmatprep.subr.mxu0 0.0
    %1804 = vmatpush1.msra.mxu0 0.0
    %1805 = vmatprep.subr.mxu0 0.0
    %1806 = vmatpush1.msra.mxu0 0.0
    %1807 = vmatprep.subr.mxu0 0.0
    %1808 = vmatpush1.msra.mxu0 0.0
    %1809 = vmatprep.subr.mxu0 0.0
    %1810 = vmatpush1.msra.mxu0 0.0
    %1811 = vmatprep.subr.mxu0 0.0
    %1812 = vmatpush1.msra.mxu0 0.0
    %1813 = vmatprep.subr.mxu0 0.0
    %1814 = vmatpush1.msra.mxu0 0.0
    %1815 = vmatprep.subr.mxu0 0.0
    %1816 = vmatpush1.msra.mxu0 0.0
    %1817 = vmatprep.subr.mxu0 0.0
    %1818 = vmatpush1.msra.mxu0 0.0
    %1819 = vmatprep.subr.mxu0 0.0
    %1820 = vmatpush1.msra.mxu0 0.0
    %1821 = vmatprep.subr.mxu0 0.0
    %1822 = vmatpush1.msra.mxu0 0.0
    %1823 = vmatprep.subr.mxu0 0.0
    %1824 = vmatpush1.msra.mxu0 0.0
    %1825 = vmatprep.subr.mxu0 0.0
    %1826 = vmatpush1.msra.mxu0 0.0
    %1827 = vmatprep.subr.mxu0 0.0
    %1828 = vmatpush1.msra.mxu0 0.0
    %1829 = vmatprep.subr.mxu0 0.0
    %1830 = vmatpush1.msra.mxu0 0.0
    %1831 = vmatprep.mubr.f32.mxu0 0.0
    %v1832 = vand.u32 %v1283, 4294901760
    %1833 = vmatmul.mubr.f32.gmra.mrb[0].mxu0 %v1832
    %v1834 = vpop.f32.mrb[0].mxu0
    %v1835 = vadd.f32 %v1716, %v1834
    %v1836 = vpop.f32.mrb[0].mxu0
    %1837 = vdwg.mxu0
    %1838 = vmatprep.subr.mxu0 0.0
    %v1839 = vand.u32 %v624, 4294901760
    %1840 = vmatpush1.msra.mxu0 %v1839
    %1841 = vmatprep.subr.mxu0 0.0
    %v1842 = vand.u32 %v625, 4294901760
    %1843 = vmatpush1.msra.mxu0 %v1842
    %1844 = vmatprep.subr.mxu0 0.0
    %v1845 = vand.u32 %v626, 4294901760
    %1846 = vmatpush1.msra.mxu0 %v1845
    %1847 = vmatprep.subr.mxu0 0.0
    %v1848 = vand.u32 %v627, 4294901760
    %1849 = vmatpush1.msra.mxu0 %v1848
    %1850 = vmatprep.subr.mxu0 0.0
    %v1851 = vand.u32 %v628, 4294901760
    %1852 = vmatpush1.msra.mxu0 %v1851
    %1853 = vmatprep.subr.mxu0 0.0
    %v1854 = vand.u32 %v629, 4294901760
    %1855 = vmatpush1.msra.mxu0 %v1854
    %1856 = vmatprep.subr.mxu0 0.0
    %v1857 = vand.u32 %v630, 4294901760
    %1858 = vmatpush1.msra.mxu0 %v1857
    %1859 = vmatprep.subr.mxu0 0.0
    %v1860 = vand.u32 %v631, 4294901760
    %1861 = vmatpush1.msra.mxu0 %v1860
    %1862 = vmatprep.subr.mxu0 0.0
    %v1863 = vand.u32 %v632, 4294901760
    %1864 = vmatpush1.msra.mxu0 %v1863
    %1865 = vmatprep.subr.mxu0 0.0
    %v1866 = vand.u32 %v633, 4294901760
    %1867 = vmatpush1.msra.mxu0 %v1866
    %1868 = vmatprep.subr.mxu0 0.0
    %v1869 = vand.u32 %v634, 4294901760
    %1870 = vmatpush1.msra.mxu0 %v1869
    %1871 = vmatprep.subr.mxu0 0.0
    %v1872 = vand.u32 %v635, 4294901760
    %1873 = vmatpush1.msra.mxu0 %v1872
    %1874 = vmatprep.subr.mxu0 0.0
    %v1875 = vand.u32 %v636, 4294901760
    %1876 = vmatpush1.msra.mxu0 %v1875
    %1877 = vmatprep.subr.mxu0 0.0
    %v1878 = vand.u32 %v637, 4294901760
    %1879 = vmatpush1.msra.mxu0 %v1878
    %1880 = vmatprep.subr.mxu0 0.0
    %v1881 = vand.u32 %v638, 4294901760
    %1882 = vmatpush1.msra.mxu0 %v1881
    %1883 = vmatprep.subr.mxu0 0.0
    %v1884 = vand.u32 %v639, 4294901760
    %1885 = vmatpush1.msra.mxu0 %v1884
    %1886 = vmatprep.subr.mxu0 0.0
    %1887 = vmatpush1.msra.mxu0 0.0
    %1888 = vmatprep.subr.mxu0 0.0
    %1889 = vmatpush1.msra.mxu0 0.0
    %1890 = vmatprep.subr.mxu0 0.0
    %1891 = vmatpush1.msra.mxu0 0.0
    %1892 = vmatprep.subr.mxu0 0.0
    %1893 = vmatpush1.msra.mxu0 0.0
    %1894 = vmatprep.subr.mxu0 0.0
    %1895 = vmatpush1.msra.mxu0 0.0
    %1896 = vmatprep.subr.mxu0 0.0
    %1897 = vmatpush1.msra.mxu0 0.0
    %1898 = vmatprep.subr.mxu0 0.0
    %1899 = vmatpush1.msra.mxu0 0.0
    %1900 = vmatprep.subr.mxu0 0.0
    %1901 = vmatpush1.msra.mxu0 0.0
    %1902 = vmatprep.subr.mxu0 0.0
    %1903 = vmatpush1.msra.mxu0 0.0
    %1904 = vmatprep.subr.mxu0 0.0
    %1905 = vmatpush1.msra.mxu0 0.0
    %1906 = vmatprep.subr.mxu0 0.0
    %1907 = vmatpush1.msra.mxu0 0.0
    %1908 = vmatprep.subr.mxu0 0.0
    %1909 = vmatpush1.msra.mxu0 0.0
    %1910 = vmatprep.subr.mxu0 0.0
    %1911 = vmatpush1.msra.mxu0 0.0
    %1912 = vmatprep.subr.mxu0 0.0
    %1913 = vmatpush1.msra.mxu0 0.0
    %1914 = vmatprep.subr.mxu0 0.0
    %1915 = vmatpush1.msra.mxu0 0.0
    %1916 = vmatprep.subr.mxu0 0.0
    %1917 = vmatpush1.msra.mxu0 0.0
    %1918 = vmatprep.mubr.f32.mxu0 0.0
    %v1919 = vand.u32 %v1283, 4294901760
    %1920 = vmatmul.mubr.f32.gmra.mrb[0].mxu0 %v1919
    %v1921 = vpop.f32.mrb[0].mxu0
    %v1922 = vadd.f32 %v1835, %v1921
    %v1923 = vpop.f32.mrb[0].mxu0
    %1924 = vdwg.mxu0
    %v1925 = vmul.f32 %v1922, 0.03125
    %v1926 = vadd.f32 %v1925, 1e-05
    %v1927 = vrsqrt.pop %v1926
    %v1928 = vmul.f32 %v1282, %v1927
    %v1929 = vlaneseq
    %v1930 = vshrl.u32 %v1929, 7
    %v1931 = vsub.s32 0, %v1930
    %v1932 = vrot.slane %v623, %v1931
    %v1933 = vmul.f32 %v1928, %v1932
    %v1934 = vlaneseq
    %v1935 = vshrl.u32 %v1934, 7
    %v1936 = vsub.s32 1, %v1935
    %v1937 = vrot.slane %v623, %v1936
    %v1938 = vadd.f32 %v1933, %v1937
    %1939 = vst [vmem:[#allocation2] sm:$0xff] %v1938
    // Predicated region
    $region18: #{resample_norm.1} parent=1 // pred_check
      _
    $region19: #{resample_norm.1} parent=1 // pred_check_branch
      %1941 = sbr.rel (0) target = $region21
    $region20: #{resample_norm.1} parent=1 // pred_region
      // Predicated region
      $region22: #{resample_norm.1} parent=20 // pred_check
        _
      $region23: #{resample_norm.1} parent=20 // pred_check_branch
        %1943 = sbr.rel (0) target = $region25
      $region24: #{resample_norm.1} parent=20 // pred_region
        // Predicated region
        $region26: #{resample_norm.1} parent=24 // pred_check
          _
        $region27: #{resample_norm.1} parent=24 // pred_check_branch
          %1945 = sbr.rel target = $region29
        $region28: #{resample_norm.1} parent=24 // pred_region
          // Predicated region
          $region41: #{resample_norm.1} parent=28 // pred_check
            _
          $region42: #{resample_norm.1} parent=28 // pred_check_branch
            %1960 = sbr.rel (0) target = $region44
          $region43: #{resample_norm.1} parent=28 // pred_region
            loop: start=0, step=1, limit=1
            $region45: #{resample_norm.1} parent=43 // loop_pre_header
              _
            $region46: #{resample_norm.1} parent=43 // loop_header
              %s1963 = sphi 0, %s1967
              %p1964 = scmp.ge.s32.totalorder %s1963, 1
              %s1968 = sphi [#allocation2], [#allocation2]
              %s1969 = sphi %s4, %s4
            $region47: #{resample_norm.1} parent=43 // loop_header_branch
              %1966 = sbr.rel (%p1964) target = $region51
            $region48: #{resample_norm.1} parent=43 // loop_body
              %v1970 = vld [vmem:[%s1968] sm:$0xf]
              %1971 = vst [vmem:[%s1969] sm:$0xf] %v1970
            $region49: #{resample_norm.1} parent=43 // loop_footer
              %s1967 = sadd.s32 1, %s1963
            $region50: #{resample_norm.1} parent=43 // loop_footer_branch
              %1962 = sbr.rel target = $region46
            $region51: #{resample_norm.1} parent=43 // loop_exit
              _
          $region44: #{resample_norm.1} parent=28 // pred_fallthru
            _
        $region29: #{resample_norm.1} parent=24 // pred_fallthru
          _
        // Predicated region
        $region30: #{resample_norm.1} parent=24 // pred_check
          _
        $region31: #{resample_norm.1} parent=24 // pred_check_branch
          %1947 = sbr.rel (0) target = $region33
        $region32: #{resample_norm.1} parent=24 // pred_region
          loop: start=0, step=1, limit=1
          $region34: #{resample_norm.1} parent=32 // loop_pre_header
            _
          $region35: #{resample_norm.1} parent=32 // loop_header
            %s1950 = sphi 0, %s1954
            %p1951 = scmp.ge.s32.totalorder %s1950, 1
            %s1955 = sphi [#allocation2], [#allocation2]
            %s1956 = sphi %s4, %s4
          $region36: #{resample_norm.1} parent=32 // loop_header_branch
            %1953 = sbr.rel (%p1951) target = $region40
          $region37: #{resample_norm.1} parent=32 // loop_body
            %v1957 = vld [vmem:[%s1955] sm:$0xf]
            %1958 = vst [vmem:[%s1956] sm:$0xf] %v1957
          $region38: #{resample_norm.1} parent=32 // loop_footer
            %s1954 = sadd.s32 1, %s1950
          $region39: #{resample_norm.1} parent=32 // loop_footer_branch
            %1949 = sbr.rel target = $region35
          $region40: #{resample_norm.1} parent=32 // loop_exit
            _
        $region33: #{resample_norm.1} parent=24 // pred_fallthru
          _
      $region25: #{resample_norm.1} parent=20 // pred_fallthru
        _
      %1972 = vnop
    $region21: #{resample_norm.1} parent=1 // pred_fallthru
      _
    // Predicated region
    $region52: #{resample_norm.1} parent=1 // pred_check
      _
    $region53: #{resample_norm.1} parent=1 // pred_check_branch
      %1974 = sbr.rel (0) target = $region55
    $region54: #{resample_norm.1} parent=1 // pred_region
      _
    $region55: #{resample_norm.1} parent=1 // pred_fallthru
      _

</llo_original>
